<compile_context>
chip_gen: v6e
topology: v6e:2x2x1
jax: 0.10.0
libtpu: 0.0.40
codegen_flags: <defaults>
</compile_context>

<pallas_src>
import functools
from math import sqrt

import jax
import jax.numpy as jnp
from jax.experimental import pallas as pl
from jax.experimental.pallas import tpu as pltpu

# Large finite negative (like the reference flash kernel) instead of -inf: masked
# weights still underflow to exactly 0 after exp, but no inf/NaN arithmetic anywhere.
_MASK_VALUE = -0.7 * float(jnp.finfo(jnp.float32).max)


def _flash_attention_kernel(q_ref, k_ref, v_ref, o_ref, m_ref, l_ref, acc_ref, *,
                            scale, causal, H, E, D, tq, tk, mxu_dtype):
    """One (batch, q-tile, kv-tile) grid step.

    q_ref: (1, tq, H*E)   k_ref: (1, tk, H*E)   v_ref: (1, tk, H*D)
    o_ref: (1, tq, H*D)   m_ref/l_ref: (H, tq, 1) f32   acc_ref: (tq, H*D) f32
    """
    qi = pl.program_id(1)
    ki = pl.program_id(2)
    n_kv = pl.num_programs(2)

    @pl.when(ki == 0)
    def _init():
        m_ref[...] = jnp.full(m_ref.shape, _MASK_VALUE, dtype=m_ref.dtype)
        l_ref[...] = jnp.zeros(l_ref.shape, dtype=l_ref.dtype)
        acc_ref[...] = jnp.zeros(acc_ref.shape, dtype=acc_ref.dtype)

    def _compute():
        # Fold the softmax scale into Q (f32 multiply, then cast once for the MXU).
        # Equivalent to PyTorch's mask-then-scale because the mask is applied to the
        # scores directly below (valid for the default scale = 1/sqrt(E) > 0).
        q = (q_ref[0].astype(jnp.float32) * scale).astype(mxu_dtype)   # (tq, H*E)
        k = k_ref[0].astype(mxu_dtype)                                  # (tk, H*E)
        v = v_ref[0]                                                    # (tk, H*D)

        if causal:
            # Per-tile mask from tiny (tq, tk) iotas + global tile offsets.
            row = qi * tq + jax.lax.broadcasted_iota(jnp.int32, (tq, tk), 0)
            col = ki * tk + jax.lax.broadcasted_iota(jnp.int32, (tq, tk), 1)
            future = col > row

        # NOTE: static unroll over heads; with E=D=32 the MXU contraction depth is
        # short, compensated by tq/tk >= 256 defaults at production shapes.
        for h in range(H):
            q_h = q[:, h * E:(h + 1) * E]          # (tq, E)
            k_h = k[:, h * E:(h + 1) * E]          # (tk, E)
            v_h = v[:, h * D:(h + 1) * D]          # (tk, D)

            # scores = Q_h @ K_h^T : contract on E for both operands (no transpose).
            s = jax.lax.dot_general(
                q_h, k_h, dimension_numbers=(((1,), (1,)), ((), ())),
                preferred_element_type=jnp.float32)                     # (tq, tk) f32

            if causal:
                s = jnp.where(future, _MASK_VALUE, s)

            # Online (streaming) softmax update for this kv tile.
            m_prev = m_ref[h]                                           # (tq, 1)
            m_cur = jnp.max(s, axis=-1, keepdims=True)
            m_new = jnp.maximum(m_prev, m_cur)
            alpha = jnp.exp(m_prev - m_new)                             # (tq, 1)
            p = jnp.exp(s - m_new)                                      # (tq, tk) f32

            l_ref[h] = alpha * l_ref[h] + jnp.sum(p, axis=-1, keepdims=True)
            m_ref[h] = m_new

            pv = jax.lax.dot_general(
                p.astype(mxu_dtype), v_h.astype(mxu_dtype),
                dimension_numbers=(((1,), (0,)), ((), ())),
                preferred_element_type=jnp.float32)                     # (tq, D)

            sl = slice(h * D, (h + 1) * D)
            acc_ref[:, sl] = alpha * acc_ref[:, sl] + pv

    if causal:
        # Causal tile skipping: kv tiles entirely in the masked future are never
        # computed (their blocks are still DMA'd; shrinking the trip count via
        # scalar prefetch is a further optimization).
        pl.when(ki * tk <= qi * tq + (tq - 1))(_compute)
    else:
        _compute()

    @pl.when(ki == n_kv - 1)
    def _finalize():
        # Exact reciprocal/divide, once per q tile (the approximate EUP reciprocal
        # previously exceeded the verification tolerance).
        for h in range(H):
            sl = slice(h * D, (h + 1) * D)
            acc_ref[:, sl] = acc_ref[:, sl] / l_ref[h]
        # Single lane-dense full-width store of the (tq, H*D) slab.
        o_ref[0] = acc_ref[...].astype(o_ref.dtype)


def full_attention(queries, keys, values, *, scale=None, mask_flag=True,
                   block_q=256, block_k=256, mxu_dtype=None, vmem_limit_bytes=None):
    """queries: [B, L, H, E], keys: [B, S, H, E], values: [B, S, H, D]
    Returns V: [B, L, H, D] (output_attention=False -> attention matrix not returned).

    Per-generation tile guidance: v6e can use block_q=block_k=512 (raise
    vmem_limit_bytes accordingly); v7x keep 256/256-512 (64 MiB physical VMEM);
    v5e use multiples of 128.
    """
    B, L, H, E = queries.shape
    _, S, _, D = values.shape
    if scale is None:
        scale = 1.0 / sqrt(E)
    if mask_flag:
        # Mirrors PyTorch TriangularCausalMask(B, L): only well-defined for L == S.
        assert L == S, "causal mask_flag=True requires L == S"

    tq = min(block_q, L)
    tk = min(block_k, S)
    assert L % tq == 0 and S % tk == 0, "L/S must be divisible by the tile sizes"

    mxu_dtype = mxu_dtype or queries.dtype   # bf16 inputs -> native bf16 MXU path

    # Free reshapes (contiguous trailing-dim merges): no HBM transposes or copies.
    q2 = queries.reshape(B, L, H * E)
    k2 = keys.reshape(B, S, H * E)
    v2 = values.reshape(B, S, H * D)

    if vmem_limit_bytes is None:
        itemsize = jnp.dtype(queries.dtype).itemsize
        blk_bytes = 2 * itemsize * (tq + tk) * H * (E + D)          # double-buffered blocks
        scr_bytes = 4 * (tq * H * D + 2 * H * max(tq, 8) * 128)     # f32 acc + padded m/l
        # 4x headroom, floored at 32 MiB, capped at 56 MiB so it also fits under
        # v7x's 64 MiB physical VMEM.
        vmem_limit_bytes = int(min(max(4 * (blk_bytes + scr_bytes), 32 << 20), 56 << 20))

    kernel = functools.partial(
        _flash_attention_kernel,
        scale=float(scale), causal=bool(mask_flag),
        H=H, E=E, D=D, tq=tq, tk=tk, mxu_dtype=mxu_dtype)

    out_flat = pl.pallas_call(
        kernel,
        out_shape=jax.ShapeDtypeStruct((B, L, H * D), queries.dtype),
        grid_spec=pltpu.PrefetchScalarGridSpec(
            num_scalar_prefetch=0,
            grid=(B, L // tq, S // tk),            # kv axis last (reduction)
            in_specs=[
                pl.BlockSpec((1, tq, H * E), lambda b, qi, ki: (b, qi, 0)),
                pl.BlockSpec((1, tk, H * E), lambda b, qi, ki: (b, ki, 0)),
                pl.BlockSpec((1, tk, H * D), lambda b, qi, ki: (b, ki, 0)),
            ],
            out_specs=pl.BlockSpec((1, tq, H * D), lambda b, qi, ki: (b, qi, 0)),
            scratch_shapes=[
                pltpu.VMEM((H, tq, 1), jnp.float32),    # running max m
                pltpu.VMEM((H, tq, 1), jnp.float32),    # running denom l
                pltpu.VMEM((tq, H * D), jnp.float32),   # output accumulator slab
            ],
        ),
        compiler_params=pltpu.CompilerParams(
            dimension_semantics=("parallel", "parallel", "arbitrary"),
            vmem_limit_bytes=vmem_limit_bytes,
        ),
    )(q2, k2, v2)

    # Free split of the trailing dim back to the PyTorch layout.
    return out_flat.reshape(B, L, H, D)


def _reference(queries, keys, values, *, scale=None, mask_flag=True):
    B, L, H, E = queries.shape
    scale = scale if scale is not None else 1.0 / sqrt(E)
    scores = jnp.einsum("blhe,bshe->bhls", queries, keys)
    if mask_flag:
        S = keys.shape[1]
        mask = jnp.triu(jnp.ones((L, S), dtype=bool), k=1)
        scores = jnp.where(mask[None, None], -jnp.inf, scores)
    a = jax.nn.softmax(scale * scores, axis=-1)
    return jnp.einsum("bhls,bshd->blhd", a, values)


if __name__ == "__main__":
    B, L, S, H, E, D = 2, 8, 8, 4, 32, 32
    key = jax.random.PRNGKey(0)
    kq, kk, kv = jax.random.split(key, 3)
    queries = jax.random.normal(kq, (B, L, H, E), dtype=jnp.float32)
    keys = jax.random.normal(kk, (B, S, H, E), dtype=jnp.float32)
    values = jax.random.normal(kv, (B, S, H, D), dtype=jnp.float32)

    # 1) Default path (mask_flag=True, attn_mask=None -> causal), f32 end-to-end.
    out = full_attention(queries, keys, values)
    out = jax.block_until_ready(out)
    ref = _reference(queries, keys, values)
    assert out.shape == (B, L, H, D)
    assert jnp.allclose(out, ref, atol=1e-4, rtol=1e-4), "causal f32 mismatch"

    # 2) Non-masked path (mask_flag=False).
    out_nm = jax.block_until_ready(
        full_attention(queries, keys, values, mask_flag=False))
    ref_nm = _reference(queries, keys, values, mask_flag=False)
    assert jnp.allclose(out_nm, ref_nm, atol=1e-4, rtol=1e-4), "non-causal mismatch"

    # 3) bf16 activations exercise the native bf16 MXU path (loose tolerance:
    #    bf16 probability/output rounding).
    qb = queries.astype(jnp.bfloat16)
    kb = keys.astype(jnp.bfloat16)
    vb = values.astype(jnp.bfloat16)
    out_bf = jax.block_until_ready(full_attention(qb, kb, vb))
    ref_bf = _reference(qb.astype(jnp.float32), kb.astype(jnp.float32),
                        vb.astype(jnp.float32))
    assert jnp.allclose(out_bf.astype(jnp.float32), ref_bf,
                        atol=5e-2, rtol=5e-2), "bf16 mismatch"

    print("KERNEL_OK")
</pallas_src>

<mosaic_0001>
module attributes {stable_mosaic.version = 11 : i64} {
  func.func @_flash_attention_kernel(%arg0: i32, %arg1: i32, %arg2: i32, %arg3: memref<1x8x128xf32, #tpu.memory_space<vmem>>, %arg4: memref<1x8x128xf32, #tpu.memory_space<vmem>>, %arg5: memref<1x8x128xf32, #tpu.memory_space<vmem>>, %arg6: memref<1x8x128xf32, #tpu.memory_space<vmem>>, %arg7: memref<4x8x1xf32, #tpu.memory_space<vmem>>, %arg8: memref<4x8x1xf32, #tpu.memory_space<vmem>>, %arg9: memref<8x128xf32, #tpu.memory_space<vmem>>) attributes {dimension_semantics = [#tpu.dimension_semantics<parallel>, #tpu.dimension_semantics<parallel>, #tpu.dimension_semantics<arbitrary>], iteration_bounds = array<i64: 2, 1, 1>, scalar_prefetch = 0 : i64, scratch_operands = 3 : i64, tpu.core_type = #tpu.core_type<tc>, window_params = [{transform_indices = @transform_0, window_bounds = array<i64: 1, 8, 128>}, {transform_indices = @transform_1, window_bounds = array<i64: 1, 8, 128>}, {transform_indices = @transform_2, window_bounds = array<i64: 1, 8, 128>}, {transform_indices = @transform_3, window_bounds = array<i64: 1, 8, 128>}]} {
    %c0_i32 = arith.constant 0 : i32
    %0 = arith.cmpi eq, %arg2, %c0_i32 : i32
    %1 = arith.extui %0 : i1 to i32
    %c0_i32_0 = arith.constant 0 : i32
    %2 = arith.cmpi ne, %1, %c0_i32_0 : i32
    scf.if %2 {
      %cst = arith.constant -2.38197633E+38 : f32
      %12 = vector.broadcast %cst : f32 to vector<4x8x1xf32>
      %c0 = arith.constant 0 : index
      %c0_5 = arith.constant 0 : index
      %c0_6 = arith.constant 0 : index
      %13 = vector.load %arg7[%c0, %c0_5, %c0_6] : memref<4x8x1xf32, #tpu.memory_space<vmem>>, vector<4x8x1xf32>
      tpu.vector_store %arg7[%c0, %c0_5, %c0_6], %12 {strides = array<i32>} : memref<4x8x1xf32, #tpu.memory_space<vmem>>, vector<4x8x1xf32>,
      %cst_7 = arith.constant 0.000000e+00 : f32
      %14 = vector.broadcast %cst_7 : f32 to vector<4x8x1xf32>
      %c0_8 = arith.constant 0 : index
      %c0_9 = arith.constant 0 : index
      %c0_10 = arith.constant 0 : index
      %15 = vector.load %arg8[%c0_8, %c0_9, %c0_10] : memref<4x8x1xf32, #tpu.memory_space<vmem>>, vector<4x8x1xf32>
      tpu.vector_store %arg8[%c0_8, %c0_9, %c0_10], %14 {strides = array<i32>} : memref<4x8x1xf32, #tpu.memory_space<vmem>>, vector<4x8x1xf32>,
      %cst_11 = arith.constant 0.000000e+00 : f32
      %16 = vector.broadcast %cst_11 : f32 to vector<8x128xf32>
      %c0_12 = arith.constant 0 : index
      %c0_13 = arith.constant 0 : index
      %17 = vector.load %arg9[%c0_12, %c0_13] : memref<8x128xf32, #tpu.memory_space<vmem>>, vector<8x128xf32>
      tpu.vector_store %arg9[%c0_12, %c0_13], %16 {strides = array<i32>} : memref<8x128xf32, #tpu.memory_space<vmem>>, vector<8x128xf32>,
    } else {
    }
    %c8_i32 = arith.constant 8 : i32
    %3 = arith.muli %arg2, %c8_i32 : i32
    %c8_i32_1 = arith.constant 8 : i32
    %4 = arith.muli %arg1, %c8_i32_1 : i32
    %c7_i32 = arith.constant 7 : i32
    %5 = arith.addi %4, %c7_i32 : i32
    %6 = arith.cmpi sle, %3, %5 : i32
    %7 = arith.extui %6 : i1 to i32
    %c0_i32_2 = arith.constant 0 : i32
    %8 = arith.cmpi ne, %7, %c0_i32_2 : i32
    scf.if %8 {
      %c0 = arith.constant 0 : index
      %c0_5 = arith.constant 0 : index
      %c0_6 = arith.constant 0 : index
      %12 = vector.load %arg3[%c0, %c0_5, %c0_6] : memref<1x8x128xf32, #tpu.memory_space<vmem>>, vector<1x8x128xf32>
      %13 = vector.shape_cast %12 : vector<1x8x128xf32> to vector<8x128xf32>
      %cst = arith.constant 0.176776692 : f32
      %14 = vector.broadcast %cst : f32 to vector<8x128xf32>
      %15 = arith.mulf %13, %14 : vector<8x128xf32>
      %c0_7 = arith.constant 0 : index
      %c0_8 = arith.constant 0 : index
      %c0_9 = arith.constant 0 : index
      %16 = vector.load %arg4[%c0_7, %c0_8, %c0_9] : memref<1x8x128xf32, #tpu.memory_space<vmem>>, vector<1x8x128xf32>
      %17 = vector.shape_cast %16 : vector<1x8x128xf32> to vector<8x128xf32>
      %c0_10 = arith.constant 0 : index
      %c0_11 = arith.constant 0 : index
      %c0_12 = arith.constant 0 : index
      %18 = vector.load %arg5[%c0_10, %c0_11, %c0_12] : memref<1x8x128xf32, #tpu.memory_space<vmem>>, vector<1x8x128xf32>
      %19 = vector.shape_cast %18 : vector<1x8x128xf32> to vector<8x128xf32>
      %c8_i32_13 = arith.constant 8 : i32
      %20 = arith.muli %arg1, %c8_i32_13 : i32
      %21 = tpu.iota {dimensions = array<i32: 0>} : vector<8x8xi32>
      %22 = vector.broadcast %20 : i32 to vector<8x8xi32>
      %23 = arith.addi %22, %21 : vector<8x8xi32>
      %c8_i32_14 = arith.constant 8 : i32
      %24 = arith.muli %arg2, %c8_i32_14 : i32
      %25 = tpu.iota {dimensions = array<i32: 1>} : vector<8x8xi32>
      %26 = vector.broadcast %24 : i32 to vector<8x8xi32>
      %27 = arith.addi %26, %25 : vector<8x8xi32>
      %28 = arith.cmpi sgt, %27, %23 : vector<8x8xi32>
      %29 = vector.extract_strided_slice %15 {offsets = [0, 0], sizes = [8, 32], strides = [1, 1]} : vector<8x128xf32> to vector<8x32xf32>
      %30 = vector.extract_strided_slice %17 {offsets = [0, 0], sizes = [8, 32], strides = [1, 1]} : vector<8x128xf32> to vector<8x32xf32>
      %31 = vector.extract_strided_slice %19 {offsets = [0, 0], sizes = [8, 32], strides = [1, 1]} : vector<8x128xf32> to vector<8x32xf32>
      %cst_15 = arith.constant dense<0.000000e+00> : vector<8x8xf32>
      %32 = tpu.matmul %29, %30, %cst_15 {dimension_numbers = #tpu.dot_dimension_numbers<[1], [1], [0], [0], [0, 0, 1, 0], [], []>} : vector<8x32xf32>, vector<8x32xf32>, vector<8x8xf32> -> vector<8x8xf32>
      %cst_16 = arith.constant -2.38197633E+38 : f32
      %33 = vector.broadcast %cst_16 : f32 to vector<8x8xf32>
      %34 = arith.select %28, %33, %32 : vector<8x8xi1>, vector<8x8xf32>
      %c0_17 = arith.constant 0 : index
      %c0_18 = arith.constant 0 : index
      %c0_19 = arith.constant 0 : index
      %35 = vector.load %arg7[%c0_17, %c0_18, %c0_19] : memref<4x8x1xf32, #tpu.memory_space<vmem>>, vector<1x8x1xf32>
      %36 = vector.shape_cast %35 : vector<1x8x1xf32> to vector<8x1xf32>
      %cst_20 = arith.constant dense<0xFF800000> : vector<8xf32>
      %37 = vector.multi_reduction <maximumf>, %34, %cst_20 [1] : vector<8x8xf32> to vector<8xf32>
      %38 = vector.shape_cast %37 : vector<8xf32> to vector<8x1xf32>
      %39 = arith.maximumf %36, %38 : vector<8x1xf32>
      %40 = arith.subf %36, %39 : vector<8x1xf32>
      %41 = math.exp %40 : vector<8x1xf32>
      %42 = vector.broadcast %39 : vector<8x1xf32> to vector<8x8xf32>
      %43 = arith.subf %34, %42 : vector<8x8xf32>
      %44 = math.exp %43 : vector<8x8xf32>
      %c0_21 = arith.constant 0 : index
      %c0_22 = arith.constant 0 : index
      %c0_23 = arith.constant 0 : index
      %45 = vector.load %arg8[%c0_21, %c0_22, %c0_23] : memref<4x8x1xf32, #tpu.memory_space<vmem>>, vector<1x8x1xf32>
      %46 = vector.shape_cast %45 : vector<1x8x1xf32> to vector<8x1xf32>
      %47 = arith.mulf %41, %46 : vector<8x1xf32>
      %cst_24 = arith.constant dense<0.000000e+00> : vector<8xf32>
      %48 = vector.multi_reduction <add>, %44, %cst_24 [1] : vector<8x8xf32> to vector<8xf32>
      %49 = vector.shape_cast %48 : vector<8xf32> to vector<8x1xf32>
      %50 = arith.addf %47, %49 : vector<8x1xf32>
      %c0_25 = arith.constant 0 : index
      %c0_26 = arith.constant 0 : index
      %c0_27 = arith.constant 0 : index
      %51 = vector.load %arg8[%c0_25, %c0_26, %c0_27] : memref<4x8x1xf32, #tpu.memory_space<vmem>>, vector<1x8x1xf32>
      %52 = vector.shape_cast %51 : vector<1x8x1xf32> to vector<8x1xf32>
      %53 = vector.shape_cast %50 : vector<8x1xf32> to vector<1x8x1xf32>
      tpu.vector_store %arg8[%c0_25, %c0_26, %c0_27], %53 {strides = array<i32>} : memref<4x8x1xf32, #tpu.memory_space<vmem>>, vector<1x8x1xf32>,
      %c0_28 = arith.constant 0 : index
      %c0_29 = arith.constant 0 : index
      %c0_30 = arith.constant 0 : index
      %54 = vector.load %arg7[%c0_28, %c0_29, %c0_30] : memref<4x8x1xf32, #tpu.memory_space<vmem>>, vector<1x8x1xf32>
      %55 = vector.shape_cast %54 : vector<1x8x1xf32> to vector<8x1xf32>
      %56 = vector.shape_cast %39 : vector<8x1xf32> to vector<1x8x1xf32>
      tpu.vector_store %arg7[%c0_28, %c0_29, %c0_30], %56 {strides = array<i32>} : memref<4x8x1xf32, #tpu.memory_space<vmem>>, vector<1x8x1xf32>,
      %cst_31 = arith.constant dense<0.000000e+00> : vector<8x32xf32>
      %57 = tpu.matmul %44, %31, %cst_31 {dimension_numbers = #tpu.dot_dimension_numbers<[1], [0], [0], [1], [0, 0, 1, 1], [], []>} : vector<8x8xf32>, vector<8x32xf32>, vector<8x32xf32> -> vector<8x32xf32>
      %c0_32 = arith.constant 0 : index
      %c0_33 = arith.constant 0 : index
      %58 = vector.load %arg9[%c0_32, %c0_33] : memref<8x128xf32, #tpu.memory_space<vmem>>, vector<8x32xf32>
      %59 = vector.broadcast %41 : vector<8x1xf32> to vector<8x32xf32>
      %60 = arith.mulf %59, %58 : vector<8x32xf32>
      %61 = arith.addf %60, %57 : vector<8x32xf32>
      %c0_34 = arith.constant 0 : index
      %c0_35 = arith.constant 0 : index
      %62 = vector.load %arg9[%c0_34, %c0_35] : memref<8x128xf32, #tpu.memory_space<vmem>>, vector<8x32xf32>
      tpu.vector_store %arg9[%c0_34, %c0_35], %61 {strides = array<i32>} : memref<8x128xf32, #tpu.memory_space<vmem>>, vector<8x32xf32>,
      %63 = vector.extract_strided_slice %15 {offsets = [0, 32], sizes = [8, 32], strides = [1, 1]} : vector<8x128xf32> to vector<8x32xf32>
      %64 = vector.extract_strided_slice %17 {offsets = [0, 32], sizes = [8, 32], strides = [1, 1]} : vector<8x128xf32> to vector<8x32xf32>
      %65 = vector.extract_strided_slice %19 {offsets = [0, 32], sizes = [8, 32], strides = [1, 1]} : vector<8x128xf32> to vector<8x32xf32>
      %cst_36 = arith.constant dense<0.000000e+00> : vector<8x8xf32>
      %66 = tpu.matmul %63, %64, %cst_36 {dimension_numbers = #tpu.dot_dimension_numbers<[1], [1], [0], [0], [0, 0, 1, 0], [], []>} : vector<8x32xf32>, vector<8x32xf32>, vector<8x8xf32> -> vector<8x8xf32>
      %cst_37 = arith.constant -2.38197633E+38 : f32
      %67 = vector.broadcast %cst_37 : f32 to vector<8x8xf32>
      %68 = arith.select %28, %67, %66 : vector<8x8xi1>, vector<8x8xf32>
      %c1 = arith.constant 1 : index
      %c0_38 = arith.constant 0 : index
      %c0_39 = arith.constant 0 : index
      %69 = vector.load %arg7[%c1, %c0_38, %c0_39] : memref<4x8x1xf32, #tpu.memory_space<vmem>>, vector<1x8x1xf32>
      %70 = vector.shape_cast %69 : vector<1x8x1xf32> to vector<8x1xf32>
      %cst_40 = arith.constant dense<0xFF800000> : vector<8xf32>
      %71 = vector.multi_reduction <maximumf>, %68, %cst_40 [1] : vector<8x8xf32> to vector<8xf32>
      %72 = vector.shape_cast %71 : vector<8xf32> to vector<8x1xf32>
      %73 = arith.maximumf %70, %72 : vector<8x1xf32>
      %74 = arith.subf %70, %73 : vector<8x1xf32>
      %75 = math.exp %74 : vector<8x1xf32>
      %76 = vector.broadcast %73 : vector<8x1xf32> to vector<8x8xf32>
      %77 = arith.subf %68, %76 : vector<8x8xf32>
      %78 = math.exp %77 : vector<8x8xf32>
      %c1_41 = arith.constant 1 : index
      %c0_42 = arith.constant 0 : index
      %c0_43 = arith.constant 0 : index
      %79 = vector.load %arg8[%c1_41, %c0_42, %c0_43] : memref<4x8x1xf32, #tpu.memory_space<vmem>>, vector<1x8x1xf32>
      %80 = vector.shape_cast %79 : vector<1x8x1xf32> to vector<8x1xf32>
      %81 = arith.mulf %75, %80 : vector<8x1xf32>
      %cst_44 = arith.constant dense<0.000000e+00> : vector<8xf32>
      %82 = vector.multi_reduction <add>, %78, %cst_44 [1] : vector<8x8xf32> to vector<8xf32>
      %83 = vector.shape_cast %82 : vector<8xf32> to vector<8x1xf32>
      %84 = arith.addf %81, %83 : vector<8x1xf32>
      %c1_45 = arith.constant 1 : index
      %c0_46 = arith.constant 0 : index
      %c0_47 = arith.constant 0 : index
      %85 = vector.load %arg8[%c1_45, %c0_46, %c0_47] : memref<4x8x1xf32, #tpu.memory_space<vmem>>, vector<1x8x1xf32>
      %86 = vector.shape_cast %85 : vector<1x8x1xf32> to vector<8x1xf32>
      %87 = vector.shape_cast %84 : vector<8x1xf32> to vector<1x8x1xf32>
      tpu.vector_store %arg8[%c1_45, %c0_46, %c0_47], %87 {strides = array<i32>} : memref<4x8x1xf32, #tpu.memory_space<vmem>>, vector<1x8x1xf32>,
      %c1_48 = arith.constant 1 : index
      %c0_49 = arith.constant 0 : index
      %c0_50 = arith.constant 0 : index
      %88 = vector.load %arg7[%c1_48, %c0_49, %c0_50] : memref<4x8x1xf32, #tpu.memory_space<vmem>>, vector<1x8x1xf32>
      %89 = vector.shape_cast %88 : vector<1x8x1xf32> to vector<8x1xf32>
      %90 = vector.shape_cast %73 : vector<8x1xf32> to vector<1x8x1xf32>
      tpu.vector_store %arg7[%c1_48, %c0_49, %c0_50], %90 {strides = array<i32>} : memref<4x8x1xf32, #tpu.memory_space<vmem>>, vector<1x8x1xf32>,
      %cst_51 = arith.constant dense<0.000000e+00> : vector<8x32xf32>
      %91 = tpu.matmul %78, %65, %cst_51 {dimension_numbers = #tpu.dot_dimension_numbers<[1], [0], [0], [1], [0, 0, 1, 1], [], []>} : vector<8x8xf32>, vector<8x32xf32>, vector<8x32xf32> -> vector<8x32xf32>
      %c0_52 = arith.constant 0 : index
      %c32 = arith.constant 32 : index
      %92 = vector.load %arg9[%c0_52, %c32] : memref<8x128xf32, #tpu.memory_space<vmem>>, vector<8x32xf32>
      %93 = vector.broadcast %75 : vector<8x1xf32> to vector<8x32xf32>
      %94 = arith.mulf %93, %92 : vector<8x32xf32>
      %95 = arith.addf %94, %91 : vector<8x32xf32>
      %c0_53 = arith.constant 0 : index
      %c32_54 = arith.constant 32 : index
      %96 = vector.load %arg9[%c0_53, %c32_54] : memref<8x128xf32, #tpu.memory_space<vmem>>, vector<8x32xf32>
      tpu.vector_store %arg9[%c0_53, %c32_54], %95 {strides = array<i32>} : memref<8x128xf32, #tpu.memory_space<vmem>>, vector<8x32xf32>,
      %97 = vector.extract_strided_slice %15 {offsets = [0, 64], sizes = [8, 32], strides = [1, 1]} : vector<8x128xf32> to vector<8x32xf32>
      %98 = vector.extract_strided_slice %17 {offsets = [0, 64], sizes = [8, 32], strides = [1, 1]} : vector<8x128xf32> to vector<8x32xf32>
      %99 = vector.extract_strided_slice %19 {offsets = [0, 64], sizes = [8, 32], strides = [1, 1]} : vector<8x128xf32> to vector<8x32xf32>
      %cst_55 = arith.constant dense<0.000000e+00> : vector<8x8xf32>
      %100 = tpu.matmul %97, %98, %cst_55 {dimension_numbers = #tpu.dot_dimension_numbers<[1], [1], [0], [0], [0, 0, 1, 0], [], []>} : vector<8x32xf32>, vector<8x32xf32>, vector<8x8xf32> -> vector<8x8xf32>
      %cst_56 = arith.constant -2.38197633E+38 : f32
      %101 = vector.broadcast %cst_56 : f32 to vector<8x8xf32>
      %102 = arith.select %28, %101, %100 : vector<8x8xi1>, vector<8x8xf32>
      %c2 = arith.constant 2 : index
      %c0_57 = arith.constant 0 : index
      %c0_58 = arith.constant 0 : index
      %103 = vector.load %arg7[%c2, %c0_57, %c0_58] : memref<4x8x1xf32, #tpu.memory_space<vmem>>, vector<1x8x1xf32>
      %104 = vector.shape_cast %103 : vector<1x8x1xf32> to vector<8x1xf32>
      %cst_59 = arith.constant dense<0xFF800000> : vector<8xf32>
      %105 = vector.multi_reduction <maximumf>, %102, %cst_59 [1] : vector<8x8xf32> to vector<8xf32>
      %106 = vector.shape_cast %105 : vector<8xf32> to vector<8x1xf32>
      %107 = arith.maximumf %104, %106 : vector<8x1xf32>
      %108 = arith.subf %104, %107 : vector<8x1xf32>
      %109 = math.exp %108 : vector<8x1xf32>
      %110 = vector.broadcast %107 : vector<8x1xf32> to vector<8x8xf32>
      %111 = arith.subf %102, %110 : vector<8x8xf32>
      %112 = math.exp %111 : vector<8x8xf32>
      %c2_60 = arith.constant 2 : index
      %c0_61 = arith.constant 0 : index
      %c0_62 = arith.constant 0 : index
      %113 = vector.load %arg8[%c2_60, %c0_61, %c0_62] : memref<4x8x1xf32, #tpu.memory_space<vmem>>, vector<1x8x1xf32>
      %114 = vector.shape_cast %113 : vector<1x8x1xf32> to vector<8x1xf32>
      %115 = arith.mulf %109, %114 : vector<8x1xf32>
      %cst_63 = arith.constant dense<0.000000e+00> : vector<8xf32>
      %116 = vector.multi_reduction <add>, %112, %cst_63 [1] : vector<8x8xf32> to vector<8xf32>
      %117 = vector.shape_cast %116 : vector<8xf32> to vector<8x1xf32>
      %118 = arith.addf %115, %117 : vector<8x1xf32>
      %c2_64 = arith.constant 2 : index
      %c0_65 = arith.constant 0 : index
      %c0_66 = arith.constant 0 : index
      %119 = vector.load %arg8[%c2_64, %c0_65, %c0_66] : memref<4x8x1xf32, #tpu.memory_space<vmem>>, vector<1x8x1xf32>
      %120 = vector.shape_cast %119 : vector<1x8x1xf32> to vector<8x1xf32>
      %121 = vector.shape_cast %118 : vector<8x1xf32> to vector<1x8x1xf32>
      tpu.vector_store %arg8[%c2_64, %c0_65, %c0_66], %121 {strides = array<i32>} : memref<4x8x1xf32, #tpu.memory_space<vmem>>, vector<1x8x1xf32>,
      %c2_67 = arith.constant 2 : index
      %c0_68 = arith.constant 0 : index
      %c0_69 = arith.constant 0 : index
      %122 = vector.load %arg7[%c2_67, %c0_68, %c0_69] : memref<4x8x1xf32, #tpu.memory_space<vmem>>, vector<1x8x1xf32>
      %123 = vector.shape_cast %122 : vector<1x8x1xf32> to vector<8x1xf32>
      %124 = vector.shape_cast %107 : vector<8x1xf32> to vector<1x8x1xf32>
      tpu.vector_store %arg7[%c2_67, %c0_68, %c0_69], %124 {strides = array<i32>} : memref<4x8x1xf32, #tpu.memory_space<vmem>>, vector<1x8x1xf32>,
      %cst_70 = arith.constant dense<0.000000e+00> : vector<8x32xf32>
      %125 = tpu.matmul %112, %99, %cst_70 {dimension_numbers = #tpu.dot_dimension_numbers<[1], [0], [0], [1], [0, 0, 1, 1], [], []>} : vector<8x8xf32>, vector<8x32xf32>, vector<8x32xf32> -> vector<8x32xf32>
      %c0_71 = arith.constant 0 : index
      %c64 = arith.constant 64 : index
      %126 = vector.load %arg9[%c0_71, %c64] : memref<8x128xf32, #tpu.memory_space<vmem>>, vector<8x32xf32>
      %127 = vector.broadcast %109 : vector<8x1xf32> to vector<8x32xf32>
      %128 = arith.mulf %127, %126 : vector<8x32xf32>
      %129 = arith.addf %128, %125 : vector<8x32xf32>
      %c0_72 = arith.constant 0 : index
      %c64_73 = arith.constant 64 : index
      %130 = vector.load %arg9[%c0_72, %c64_73] : memref<8x128xf32, #tpu.memory_space<vmem>>, vector<8x32xf32>
      tpu.vector_store %arg9[%c0_72, %c64_73], %129 {strides = array<i32>} : memref<8x128xf32, #tpu.memory_space<vmem>>, vector<8x32xf32>,
      %131 = vector.extract_strided_slice %15 {offsets = [0, 96], sizes = [8, 32], strides = [1, 1]} : vector<8x128xf32> to vector<8x32xf32>
      %132 = vector.extract_strided_slice %17 {offsets = [0, 96], sizes = [8, 32], strides = [1, 1]} : vector<8x128xf32> to vector<8x32xf32>
      %133 = vector.extract_strided_slice %19 {offsets = [0, 96], sizes = [8, 32], strides = [1, 1]} : vector<8x128xf32> to vector<8x32xf32>
      %cst_74 = arith.constant dense<0.000000e+00> : vector<8x8xf32>
      %134 = tpu.matmul %131, %132, %cst_74 {dimension_numbers = #tpu.dot_dimension_numbers<[1], [1], [0], [0], [0, 0, 1, 0], [], []>} : vector<8x32xf32>, vector<8x32xf32>, vector<8x8xf32> -> vector<8x8xf32>
      %cst_75 = arith.constant -2.38197633E+38 : f32
      %135 = vector.broadcast %cst_75 : f32 to vector<8x8xf32>
      %136 = arith.select %28, %135, %134 : vector<8x8xi1>, vector<8x8xf32>
      %c3 = arith.constant 3 : index
      %c0_76 = arith.constant 0 : index
      %c0_77 = arith.constant 0 : index
      %137 = vector.load %arg7[%c3, %c0_76, %c0_77] : memref<4x8x1xf32, #tpu.memory_space<vmem>>, vector<1x8x1xf32>
      %138 = vector.shape_cast %137 : vector<1x8x1xf32> to vector<8x1xf32>
      %cst_78 = arith.constant dense<0xFF800000> : vector<8xf32>
      %139 = vector.multi_reduction <maximumf>, %136, %cst_78 [1] : vector<8x8xf32> to vector<8xf32>
      %140 = vector.shape_cast %139 : vector<8xf32> to vector<8x1xf32>
      %141 = arith.maximumf %138, %140 : vector<8x1xf32>
      %142 = arith.subf %138, %141 : vector<8x1xf32>
      %143 = math.exp %142 : vector<8x1xf32>
      %144 = vector.broadcast %141 : vector<8x1xf32> to vector<8x8xf32>
      %145 = arith.subf %136, %144 : vector<8x8xf32>
      %146 = math.exp %145 : vector<8x8xf32>
      %c3_79 = arith.constant 3 : index
      %c0_80 = arith.constant 0 : index
      %c0_81 = arith.constant 0 : index
      %147 = vector.load %arg8[%c3_79, %c0_80, %c0_81] : memref<4x8x1xf32, #tpu.memory_space<vmem>>, vector<1x8x1xf32>
      %148 = vector.shape_cast %147 : vector<1x8x1xf32> to vector<8x1xf32>
      %149 = arith.mulf %143, %148 : vector<8x1xf32>
      %cst_82 = arith.constant dense<0.000000e+00> : vector<8xf32>
      %150 = vector.multi_reduction <add>, %146, %cst_82 [1] : vector<8x8xf32> to vector<8xf32>
      %151 = vector.shape_cast %150 : vector<8xf32> to vector<8x1xf32>
      %152 = arith.addf %149, %151 : vector<8x1xf32>
      %c3_83 = arith.constant 3 : index
      %c0_84 = arith.constant 0 : index
      %c0_85 = arith.constant 0 : index
      %153 = vector.load %arg8[%c3_83, %c0_84, %c0_85] : memref<4x8x1xf32, #tpu.memory_space<vmem>>, vector<1x8x1xf32>
      %154 = vector.shape_cast %153 : vector<1x8x1xf32> to vector<8x1xf32>
      %155 = vector.shape_cast %152 : vector<8x1xf32> to vector<1x8x1xf32>
      tpu.vector_store %arg8[%c3_83, %c0_84, %c0_85], %155 {strides = array<i32>} : memref<4x8x1xf32, #tpu.memory_space<vmem>>, vector<1x8x1xf32>,
      %c3_86 = arith.constant 3 : index
      %c0_87 = arith.constant 0 : index
      %c0_88 = arith.constant 0 : index
      %156 = vector.load %arg7[%c3_86, %c0_87, %c0_88] : memref<4x8x1xf32, #tpu.memory_space<vmem>>, vector<1x8x1xf32>
      %157 = vector.shape_cast %156 : vector<1x8x1xf32> to vector<8x1xf32>
      %158 = vector.shape_cast %141 : vector<8x1xf32> to vector<1x8x1xf32>
      tpu.vector_store %arg7[%c3_86, %c0_87, %c0_88], %158 {strides = array<i32>} : memref<4x8x1xf32, #tpu.memory_space<vmem>>, vector<1x8x1xf32>,
      %cst_89 = arith.constant dense<0.000000e+00> : vector<8x32xf32>
      %159 = tpu.matmul %146, %133, %cst_89 {dimension_numbers = #tpu.dot_dimension_numbers<[1], [0], [0], [1], [0, 0, 1, 1], [], []>} : vector<8x8xf32>, vector<8x32xf32>, vector<8x32xf32> -> vector<8x32xf32>
      %c0_90 = arith.constant 0 : index
      %c96 = arith.constant 96 : index
      %160 = vector.load %arg9[%c0_90, %c96] : memref<8x128xf32, #tpu.memory_space<vmem>>, vector<8x32xf32>
      %161 = vector.broadcast %143 : vector<8x1xf32> to vector<8x32xf32>
      %162 = arith.mulf %161, %160 : vector<8x32xf32>
      %163 = arith.addf %162, %159 : vector<8x32xf32>
      %c0_91 = arith.constant 0 : index
      %c96_92 = arith.constant 96 : index
      %164 = vector.load %arg9[%c0_91, %c96_92] : memref<8x128xf32, #tpu.memory_space<vmem>>, vector<8x32xf32>
      tpu.vector_store %arg9[%c0_91, %c96_92], %163 {strides = array<i32>} : memref<8x128xf32, #tpu.memory_space<vmem>>, vector<8x32xf32>,
    } else {
    }
    %c0_i32_3 = arith.constant 0 : i32
    %9 = arith.cmpi eq, %arg2, %c0_i32_3 : i32
    %10 = arith.extui %9 : i1 to i32
    %c0_i32_4 = arith.constant 0 : i32
    %11 = arith.cmpi ne, %10, %c0_i32_4 : i32
    scf.if %11 {
      %c0 = arith.constant 0 : index
      %c0_5 = arith.constant 0 : index
      %12 = vector.load %arg9[%c0, %c0_5] : memref<8x128xf32, #tpu.memory_space<vmem>>, vector<8x32xf32>
      %c0_6 = arith.constant 0 : index
      %c0_7 = arith.constant 0 : index
      %c0_8 = arith.constant 0 : index
      %13 = vector.load %arg8[%c0_6, %c0_7, %c0_8] : memref<4x8x1xf32, #tpu.memory_space<vmem>>, vector<1x8x1xf32>
      %14 = vector.shape_cast %13 : vector<1x8x1xf32> to vector<8x1xf32>
      %15 = vector.broadcast %14 : vector<8x1xf32> to vector<8x32xf32>
      %16 = arith.divf %12, %15 : vector<8x32xf32>
      %c0_9 = arith.constant 0 : index
      %c0_10 = arith.constant 0 : index
      %17 = vector.load %arg9[%c0_9, %c0_10] : memref<8x128xf32, #tpu.memory_space<vmem>>, vector<8x32xf32>
      tpu.vector_store %arg9[%c0_9, %c0_10], %16 {strides = array<i32>} : memref<8x128xf32, #tpu.memory_space<vmem>>, vector<8x32xf32>,
      %c0_11 = arith.constant 0 : index
      %c32 = arith.constant 32 : index
      %18 = vector.load %arg9[%c0_11, %c32] : memref<8x128xf32, #tpu.memory_space<vmem>>, vector<8x32xf32>
      %c1 = arith.constant 1 : index
      %c0_12 = arith.constant 0 : index
      %c0_13 = arith.constant 0 : index
      %19 = vector.load %arg8[%c1, %c0_12, %c0_13] : memref<4x8x1xf32, #tpu.memory_space<vmem>>, vector<1x8x1xf32>
      %20 = vector.shape_cast %19 : vector<1x8x1xf32> to vector<8x1xf32>
      %21 = vector.broadcast %20 : vector<8x1xf32> to vector<8x32xf32>
      %22 = arith.divf %18, %21 : vector<8x32xf32>
      %c0_14 = arith.constant 0 : index
      %c32_15 = arith.constant 32 : index
      %23 = vector.load %arg9[%c0_14, %c32_15] : memref<8x128xf32, #tpu.memory_space<vmem>>, vector<8x32xf32>
      tpu.vector_store %arg9[%c0_14, %c32_15], %22 {strides = array<i32>} : memref<8x128xf32, #tpu.memory_space<vmem>>, vector<8x32xf32>,
      %c0_16 = arith.constant 0 : index
      %c64 = arith.constant 64 : index
      %24 = vector.load %arg9[%c0_16, %c64] : memref<8x128xf32, #tpu.memory_space<vmem>>, vector<8x32xf32>
      %c2 = arith.constant 2 : index
      %c0_17 = arith.constant 0 : index
      %c0_18 = arith.constant 0 : index
      %25 = vector.load %arg8[%c2, %c0_17, %c0_18] : memref<4x8x1xf32, #tpu.memory_space<vmem>>, vector<1x8x1xf32>
      %26 = vector.shape_cast %25 : vector<1x8x1xf32> to vector<8x1xf32>
      %27 = vector.broadcast %26 : vector<8x1xf32> to vector<8x32xf32>
      %28 = arith.divf %24, %27 : vector<8x32xf32>
      %c0_19 = arith.constant 0 : index
      %c64_20 = arith.constant 64 : index
      %29 = vector.load %arg9[%c0_19, %c64_20] : memref<8x128xf32, #tpu.memory_space<vmem>>, vector<8x32xf32>
      tpu.vector_store %arg9[%c0_19, %c64_20], %28 {strides = array<i32>} : memref<8x128xf32, #tpu.memory_space<vmem>>, vector<8x32xf32>,
      %c0_21 = arith.constant 0 : index
      %c96 = arith.constant 96 : index
      %30 = vector.load %arg9[%c0_21, %c96] : memref<8x128xf32, #tpu.memory_space<vmem>>, vector<8x32xf32>
      %c3 = arith.constant 3 : index
      %c0_22 = arith.constant 0 : index
      %c0_23 = arith.constant 0 : index
      %31 = vector.load %arg8[%c3, %c0_22, %c0_23] : memref<4x8x1xf32, #tpu.memory_space<vmem>>, vector<1x8x1xf32>
      %32 = vector.shape_cast %31 : vector<1x8x1xf32> to vector<8x1xf32>
      %33 = vector.broadcast %32 : vector<8x1xf32> to vector<8x32xf32>
      %34 = arith.divf %30, %33 : vector<8x32xf32>
      %c0_24 = arith.constant 0 : index
      %c96_25 = arith.constant 96 : index
      %35 = vector.load %arg9[%c0_24, %c96_25] : memref<8x128xf32, #tpu.memory_space<vmem>>, vector<8x32xf32>
      tpu.vector_store %arg9[%c0_24, %c96_25], %34 {strides = array<i32>} : memref<8x128xf32, #tpu.memory_space<vmem>>, vector<8x32xf32>,
      %c0_26 = arith.constant 0 : index
      %c0_27 = arith.constant 0 : index
      %36 = vector.load %arg9[%c0_26, %c0_27] : memref<8x128xf32, #tpu.memory_space<vmem>>, vector<8x128xf32>
      %c0_28 = arith.constant 0 : index
      %c0_29 = arith.constant 0 : index
      %c0_30 = arith.constant 0 : index
      %37 = vector.load %arg6[%c0_28, %c0_29, %c0_30] : memref<1x8x128xf32, #tpu.memory_space<vmem>>, vector<1x8x128xf32>
      %38 = vector.shape_cast %37 : vector<1x8x128xf32> to vector<8x128xf32>
      %39 = vector.shape_cast %36 : vector<8x128xf32> to vector<1x8x128xf32>
      tpu.vector_store %arg6[%c0_28, %c0_29, %c0_30], %39 {strides = array<i32>} : memref<1x8x128xf32, #tpu.memory_space<vmem>>, vector<1x8x128xf32>,
    } else {
    }
    return
  }
  func.func @transform_0(%arg0: i32, %arg1: i32, %arg2: i32) -> (i32, i32, i32) {
    %c0_i32 = arith.constant 0 : i32
    %c0_i32_0 = arith.constant 0 : i32
    return %arg0, %arg1, %c0_i32 : i32, i32, i32
  }
  func.func @transform_1(%arg0: i32, %arg1: i32, %arg2: i32) -> (i32, i32, i32) {
    %c0_i32 = arith.constant 0 : i32
    %c0_i32_0 = arith.constant 0 : i32
    return %arg0, %arg2, %c0_i32 : i32, i32, i32
  }
  func.func @transform_2(%arg0: i32, %arg1: i32, %arg2: i32) -> (i32, i32, i32) {
    %c0_i32 = arith.constant 0 : i32
    %c0_i32_0 = arith.constant 0 : i32
    return %arg0, %arg2, %c0_i32 : i32, i32, i32
  }
  func.func @transform_3(%arg0: i32, %arg1: i32, %arg2: i32) -> (i32, i32, i32) {
    %c0_i32 = arith.constant 0 : i32
    %c0_i32_0 = arith.constant 0 : i32
    return %arg0, %arg1, %c0_i32 : i32, i32, i32
  }
}

</mosaic_0001>

<llo_original>
// kernel: tpu_custom_call.1
$region0: #{tpu_custom_call.1}
  #allocation0 [shape = 'u32[]', space=smem, size = 0x4, offset = 0x4, fixed_abs, tag = 'smem constant byte address 0x4 - core index']
  #allocation1 [shape = 'u32[144,128]{1,0:T(1,128)}', space=vmem, size = 0x12000, scoped, tag = 'internal scratch']
  #allocation2 [shape = 'f32[4,8,1]{2,1,0:T(8,128)}', space=vmem, size = 0x4000, scoped, tag = 'scratch operand']
  #allocation3 [shape = 'f32[4,8,1]{2,1,0:T(8,128)}', space=vmem, size = 0x4000, scoped, tag = 'scratch operand']
  #allocation4 [shape = 'f32[8,128]{1,0:T(8,128)}', space=vmem, size = 0x1000, scoped, tag = 'scratch operand']
  %s0 = inlined_call_operand.hbm [shape: f32[2,8,128], index: 0, kind: input, shape index: {}]
  %s1 = inlined_call_operand.hbm [shape: f32[2,8,128], index: 1, kind: input, shape index: {}]
  %s2 = inlined_call_operand.hbm [shape: f32[2,8,128], index: 2, kind: input, shape index: {}]
  %s3 = inlined_call_operand.hbm [shape: f32[2,8,128], index: 3, kind: output, shape index: {}]
  %s4 = sld [smem:[#allocation0]]
  $region69: #{tpu_custom_call.1} parent=0
    _
  %s6 = ssub.s32 1, %s4
  %s7 = scalar_select 0, %s6, %s4
  $region1: #{tpu_custom_call.1} parent=0
    #allocation5 [shape = 'u8[8192]{0}', space=vmem, size = 0x2000, scoped, tag = 'input window, operand 0']
    #allocation6 [shape = 's32[2]{0}', space=sflag, size = 0x8, scoped, tag = 'scoped memory for tpu_custom_call.1']
    #allocation7 [shape = 's32[2]{0}', space=sflag, size = 0x8, scoped, tag = 'scoped memory for tpu_custom_call.1']
    #allocation8 [shape = 'u8[8192]{0}', space=vmem, size = 0x2000, scoped, tag = 'input window, operand 1']
    #allocation9 [shape = 's32[2]{0}', space=sflag, size = 0x8, scoped, tag = 'scoped memory for tpu_custom_call.1']
    #allocation10 [shape = 'u8[8192]{0}', space=vmem, size = 0x2000, scoped, tag = 'input window, operand 2']
    #allocation11 [shape = 'u8[8192]{0}', space=vmem, size = 0x2000, scoped, tag = 'output window, operand 0']
    %8 = vsyncpa [#allocation6], 0
    %s9 = scalar_lea.sflag [#allocation6], 1
    %10 = vsyncpa %s9, 0
    %11 = vsyncpa [#allocation9], 0
    %s12 = scalar_lea.sflag [#allocation9], 1
    %13 = vsyncpa %s12, 0
    %14 = vsyncpa [#allocation7], 0
    %s15 = scalar_lea.sflag [#allocation7], 1
    %16 = vsyncpa %s15, 0
    loop: start=0, step=1, limit=4
    $region2: #{tpu_custom_call.1} parent=1 // loop_pre_header
      _
    $region3: #{tpu_custom_call.1} parent=1 // loop_header
      %s18 = sphi 0, %s22
      %p19 = scmp.ge.s32.totalorder %s18, 4
      %s25 = sphi 0, %s44
      %s26 = sphi 0, %s40
      %s27 = sphi 0, %s36
      %s28 = sphi 0, %s25
      %s29 = sphi 0, %s26
      %s30 = sphi 0, %s27
      %s31 = sphi 0, %s28
      %s32 = sphi 0, %s29
      %s33 = sphi 0, %s30
      %s49 = sphi 0, %s51
      %s52 = sphi 0, %s49
      %s53 = sphi 0, %s52
      %s69 = sphi 0, %s53
      %s77 = sphi 0, %s79
      %s80 = sphi 0, %s77
      %s81 = sphi 0, %s80
      %s97 = sphi 0, %s81
      %s105 = sphi 0, %s107
      %s108 = sphi 0, %s105
      %s109 = sphi 0, %s108
      %s125 = sphi 0, %s109
      %s133 = sphi 0, %s135
      %s136 = sphi 0, %s133
      %s137 = sphi 0, %s136
      %s153 = sphi 0, %s137
    $region4: #{tpu_custom_call.1} parent=1 // loop_header_branch
      %21 = sbr.rel (%p19) target = $region8
    $region5: #{tpu_custom_call.1} parent=1 // loop_body
      %s23 = ssub.s32 %s18, 1
      %s24 = ssub.s32 %s18, 2
      %s34 = sadd.s32 1, %s27
      %p35 = scmp.ge.s32.totalorder %s34, 1
      %s36 = scalar_select %p35, 0, %s34
      %s37 = sadd.s32 1, %s26
      %s38 = scalar_select %p35, %s37, %s26
      %p39 = scmp.ge.s32.totalorder %s38, 1
      %s40 = scalar_select %p39, 0, %s38
      %s41 = sadd.s32 1, %s25
      %s42 = scalar_select %p39, %s41, %s25
      %p43 = scmp.ge.s32.totalorder %s42, 2
      %s44 = scalar_select %p43, 0, %s42
      %s45 = ssub.s32 %s25, %s44
      %s46 = ssub.s32 %s26, %s40
      %s47 = sor.u32 %s45, %s46
      %p48 = scmp.eq.s32.totalorder %s47, 0
      %s50 = sadd.s32 %s49, 1
      %s51 = scalar_select %p48, %s49, %s50
      %p54 = pneg %p48
      %p55 = scmp.eq.s32.totalorder %s18, 1
      %p56 = por %p54, %p55
      %p57 = scmp.ne.s32.totalorder %s49, %s52
      %p58 = scmp.eq.s32.totalorder %s18, 0
      %p59 = por %p57, %p58
      %p60 = scmp.ne.s32.totalorder %s49, %s52
      %p61 = scmp.eq.s32.totalorder %s23, 1
      %p62 = por %p60, %p61
      %p63 = scmp.ne.s32.totalorder %s52, %s53
      %p64 = scmp.eq.s32.totalorder %s23, 0
      %p65 = por %p63, %p64
      %p66 = scmp.ne.s32.totalorder %s52, %s53
      %p67 = scmp.eq.s32.totalorder %s24, 1
      %p68 = por %p66, %p67
      %p70 = scmp.ne.s32.totalorder %s53, %s69
      %p71 = scmp.eq.s32.totalorder %s24, 0
      %p72 = por %p70, %p71
      %s73 = ssub.s32 %s25, %s44
      %s74 = ssub.s32 %s27, %s36
      %s75 = sor.u32 %s73, %s74
      %p76 = scmp.eq.s32.totalorder %s75, 0
      %s78 = sadd.s32 %s77, 1
      %s79 = scalar_select %p76, %s77, %s78
      %p82 = pneg %p76
      %p83 = scmp.eq.s32.totalorder %s18, 1
      %p84 = por %p82, %p83
      %p85 = scmp.ne.s32.totalorder %s77, %s80
      %p86 = scmp.eq.s32.totalorder %s18, 0
      %p87 = por %p85, %p86
      %p88 = scmp.ne.s32.totalorder %s77, %s80
      %p89 = scmp.eq.s32.totalorder %s23, 1
      %p90 = por %p88, %p89
      %p91 = scmp.ne.s32.totalorder %s80, %s81
      %p92 = scmp.eq.s32.totalorder %s23, 0
      %p93 = por %p91, %p92
      %p94 = scmp.ne.s32.totalorder %s80, %s81
      %p95 = scmp.eq.s32.totalorder %s24, 1
      %p96 = por %p94, %p95
      %p98 = scmp.ne.s32.totalorder %s81, %s97
      %p99 = scmp.eq.s32.totalorder %s24, 0
      %p100 = por %p98, %p99
      %s101 = ssub.s32 %s25, %s44
      %s102 = ssub.s32 %s27, %s36
      %s103 = sor.u32 %s101, %s102
      %p104 = scmp.eq.s32.totalorder %s103, 0
      %s106 = sadd.s32 %s105, 1
      %s107 = scalar_select %p104, %s105, %s106
      %p110 = pneg %p104
      %p111 = scmp.eq.s32.totalorder %s18, 1
      %p112 = por %p110, %p111
      %p113 = scmp.ne.s32.totalorder %s105, %s108
      %p114 = scmp.eq.s32.totalorder %s18, 0
      %p115 = por %p113, %p114
      %p116 = scmp.ne.s32.totalorder %s105, %s108
      %p117 = scmp.eq.s32.totalorder %s23, 1
      %p118 = por %p116, %p117
      %p119 = scmp.ne.s32.totalorder %s108, %s109
      %p120 = scmp.eq.s32.totalorder %s23, 0
      %p121 = por %p119, %p120
      %p122 = scmp.ne.s32.totalorder %s108, %s109
      %p123 = scmp.eq.s32.totalorder %s24, 1
      %p124 = por %p122, %p123
      %p126 = scmp.ne.s32.totalorder %s109, %s125
      %p127 = scmp.eq.s32.totalorder %s24, 0
      %p128 = por %p126, %p127
      %s129 = ssub.s32 %s25, %s44
      %s130 = ssub.s32 %s26, %s40
      %s131 = sor.u32 %s129, %s130
      %p132 = scmp.eq.s32.totalorder %s131, 0
      %s134 = sadd.s32 %s133, 1
      %s135 = scalar_select %p132, %s133, %s134
      %p138 = pneg %p132
      %p139 = scmp.eq.s32.totalorder %s18, 1
      %p140 = por %p138, %p139
      %p141 = scmp.ne.s32.totalorder %s133, %s136
      %p142 = scmp.eq.s32.totalorder %s18, 0
      %p143 = por %p141, %p142
      %p144 = scmp.ne.s32.totalorder %s133, %s136
      %p145 = scmp.eq.s32.totalorder %s23, 1
      %p146 = por %p144, %p145
      %p147 = scmp.ne.s32.totalorder %s136, %s137
      %p148 = scmp.eq.s32.totalorder %s23, 0
      %p149 = por %p147, %p148
      %p150 = scmp.ne.s32.totalorder %s136, %s137
      %p151 = scmp.eq.s32.totalorder %s24, 1
      %p152 = por %p150, %p151
      %p154 = scmp.ne.s32.totalorder %s137, %s153
      %p155 = scmp.eq.s32.totalorder %s24, 0
      %p156 = por %p154, %p155
      %p157 = scmp.le.s32.totalorder 1, %s18
      %p158 = scmp.lt.s32.totalorder %s18, 3
      %p159 = pnand %p157, %p158
      %p160 = pneg %p159
      // Predicated region
      $region9: #{tpu_custom_call.1} parent=5 // pred_check
        _
      $region10: #{tpu_custom_call.1} parent=5 // pred_check_branch
        %162 = sbr.rel (%p159) target = $region12
      $region11: #{tpu_custom_call.1} parent=5 // pred_region
        %s163 = ssub.s32 %s18, 1
      $region12: #{tpu_custom_call.1} parent=5 // pred_fallthru
        _
      %p164 = scmp.lt.s32.totalorder %s18, 2
      // Predicated region
      $region13: #{tpu_custom_call.1} parent=5 // pred_check
        %p165 = pneg %p164
      $region14: #{tpu_custom_call.1} parent=5 // pred_check_branch
        %167 = sbr.rel (%p165) target = $region16
      $region15: #{tpu_custom_call.1} parent=5 // pred_region
        // Predicated region
        $region17: #{tpu_custom_call.1} parent=15 // pred_check
          %p168 = pneg %p59
        $region18: #{tpu_custom_call.1} parent=15 // pred_check_branch
          %170 = sbr.rel (%p168) target = $region20
        $region19: #{tpu_custom_call.1} parent=15 // pred_region
          %s171 = sand.u32 %s49, 1
          %s172 = scalar_lea.sflag [#allocation6], %s171
          %s173 = sand.u32 %s49, 1
          %s174 = smul.addr %s173, 8
          %s175 = scalar_lea.vmem [#allocation5], %s174
          %s177 = ssub.s32 128, 128
          %178 = vsyncadd %s172, %s177
          %s179 = sadd.s32 %s26, %s25
          %s180 = smul.addr %s179, 128
          %s181 = scalar_lea.hbm %s0, %s180
          %s183 = sshll.u32 %s175, 4
          %s184 = int_to_ptr.vmem [resolvable:$true] %s183
          %186 = dma.hbm_to_vmem [thread:$0]  %s181, 128, %s184, %s172
        $region20: #{tpu_custom_call.1} parent=15 // pred_fallthru
          _
        // Predicated region
        $region21: #{tpu_custom_call.1} parent=15 // pred_check
          %p187 = pneg %p87
        $region22: #{tpu_custom_call.1} parent=15 // pred_check_branch
          %189 = sbr.rel (%p187) target = $region24
        $region23: #{tpu_custom_call.1} parent=15 // pred_region
          %s190 = sand.u32 %s18, 1
          %s191 = scalar_lea.sflag [#allocation9], %s190
          %s192 = sand.u32 %s77, 1
          %s193 = smul.addr %s192, 8
          %s194 = scalar_lea.vmem [#allocation8], %s193
          %s196 = ssub.s32 128, 128
          %197 = vsyncadd %s191, %s196
          %s198 = sadd.s32 %s27, %s25
          %s199 = smul.addr %s198, 128
          %s200 = scalar_lea.hbm %s1, %s199
          %s202 = sshll.u32 %s194, 4
          %s203 = int_to_ptr.vmem [resolvable:$true] %s202
          %205 = dma.hbm_to_vmem [thread:$0]  %s200, 128, %s203, %s191
        $region24: #{tpu_custom_call.1} parent=15 // pred_fallthru
          _
        // Predicated region
        $region25: #{tpu_custom_call.1} parent=15 // pred_check
          %p206 = pneg %p115
        $region26: #{tpu_custom_call.1} parent=15 // pred_check_branch
          %208 = sbr.rel (%p206) target = $region28
        $region27: #{tpu_custom_call.1} parent=15 // pred_region
          %s209 = sand.u32 %s18, 1
          %s210 = scalar_lea.sflag [#allocation9], %s209
          %s211 = sand.u32 %s105, 1
          %s212 = smul.addr %s211, 8
          %s213 = scalar_lea.vmem [#allocation10], %s212
          %s215 = ssub.s32 128, 128
          %216 = vsyncadd %s210, %s215
          %s217 = sadd.s32 %s27, %s25
          %s218 = smul.addr %s217, 128
          %s219 = scalar_lea.hbm %s2, %s218
          %s221 = sshll.u32 %s213, 4
          %s222 = int_to_ptr.vmem [resolvable:$true] %s221
          %224 = dma.hbm_to_vmem [thread:$0]  %s219, 128, %s222, %s210
        $region28: #{tpu_custom_call.1} parent=15 // pred_fallthru
          _
      $region16: #{tpu_custom_call.1} parent=5 // pred_fallthru
        _
      %p225 = scmp.le.s32.totalorder 1, %s18
      %p226 = scmp.lt.s32.totalorder %s18, 3
      %p227 = pnand %p225, %p226
      %p228 = pneg %p227
      // Predicated region
      $region29: #{tpu_custom_call.1} parent=5 // pred_check
        _
      $region30: #{tpu_custom_call.1} parent=5 // pred_check_branch
        %230 = sbr.rel (%p227) target = $region32
      $region31: #{tpu_custom_call.1} parent=5 // pred_region
        %s231 = ssub.s32 %s18, 1
        %s232 = sand.u32 %s52, 1
        %s233 = scalar_lea.sflag [#allocation6], %s232
        %s234 = sand.u32 %s52, 1
        %s235 = smul.addr %s234, 8
        %s236 = scalar_lea.vmem [#allocation5], %s235
        // Predicated region
        $region33: #{tpu_custom_call.1} parent=31 // pred_check
          %p237 = pneg %p65
        $region34: #{tpu_custom_call.1} parent=31 // pred_check_branch
          %239 = sbr.rel (%p237) target = $region36
        $region35: #{tpu_custom_call.1} parent=31 // pred_region
          %240 = dma.done %s233, 128
        $region36: #{tpu_custom_call.1} parent=31 // pred_fallthru
          _
        %s241 = sand.u32 %s23, 1
        %s242 = scalar_lea.sflag [#allocation9], %s241
        %s243 = sand.u32 %s80, 1
        %s244 = smul.addr %s243, 8
        %s245 = scalar_lea.vmem [#allocation8], %s244
        // Predicated region
        $region37: #{tpu_custom_call.1} parent=31 // pred_check
          %p246 = pneg %p93
        $region38: #{tpu_custom_call.1} parent=31 // pred_check_branch
          %248 = sbr.rel (%p246) target = $region40
        $region39: #{tpu_custom_call.1} parent=31 // pred_region
          %249 = dma.done %s242, 128
        $region40: #{tpu_custom_call.1} parent=31 // pred_fallthru
          _
        %s250 = sand.u32 %s23, 1
        %s251 = scalar_lea.sflag [#allocation9], %s250
        %s252 = sand.u32 %s108, 1
        %s253 = smul.addr %s252, 8
        %s254 = scalar_lea.vmem [#allocation10], %s253
        // Predicated region
        $region41: #{tpu_custom_call.1} parent=31 // pred_check
          %p255 = pneg %p121
        $region42: #{tpu_custom_call.1} parent=31 // pred_check_branch
          %257 = sbr.rel (%p255) target = $region44
        $region43: #{tpu_custom_call.1} parent=31 // pred_region
          %258 = dma.done %s251, 128
        $region44: #{tpu_custom_call.1} parent=31 // pred_fallthru
          _
        %s259 = sand.u32 %s52, 1
        %s260 = scalar_lea.sflag [#allocation6], %s259
        %s261 = sand.u32 %s52, 1
        %s262 = smul.addr %s261, 8
        %s263 = scalar_lea.vmem [#allocation5], %s262
        %p264 = pneg %p65
        %p265 = pneg %p62
        %s266 = sand.u32 %s23, 1
        %s267 = scalar_lea.sflag [#allocation9], %s266
        %s268 = sand.u32 %s80, 1
        %s269 = smul.addr %s268, 8
        %s270 = scalar_lea.vmem [#allocation8], %s269
        %p271 = pneg %p93
        %p272 = pneg %p90
        %s273 = sand.u32 %s23, 1
        %s274 = scalar_lea.sflag [#allocation9], %s273
        %s275 = sand.u32 %s108, 1
        %s276 = smul.addr %s275, 8
        %s277 = scalar_lea.vmem [#allocation10], %s276
        %p278 = pneg %p121
        %p279 = pneg %p118
        %p280 = pneg %p149
        %p281 = pneg %p146
        %s282 = sand.u32 %s136, 1
        %s283 = scalar_lea.sflag [#allocation7], %s282
        %s284 = sand.u32 %s136, 1
        %s285 = smul.addr %s284, 8
        %s286 = scalar_lea.vmem [#allocation11], %s285
        %p287 = scmp.eq.s32.totalorder %s30, 0
        // Predicated region
        $region45: #{tpu_custom_call.1} parent=31 // pred_check
          %p288 = pneg %p287
        $region46: #{tpu_custom_call.1} parent=31 // pred_check_branch
          %290 = sbr.rel (%p288) target = $region48
        $region47: #{tpu_custom_call.1} parent=31 // pred_region
          %vm291 = vcmask 7168
          %292 = vst.msk [vmem:[#allocation2] sm:$0xff] %vm291, -2.3819763e+38
          %293 = vst.msk [vmem:[#allocation2 + $0x8] sm:$0xff] %vm291, -2.3819763e+38
          %294 = vst.msk [vmem:[#allocation2 + $0x10] sm:$0xff] %vm291, -2.3819763e+38
          %295 = vst.msk [vmem:[#allocation2 + $0x18] sm:$0xff] %vm291, -2.3819763e+38
          %296 = vst.msk [vmem:[#allocation3] sm:$0xff] %vm291, 0.0
          %297 = vst.msk [vmem:[#allocation3 + $0x8] sm:$0xff] %vm291, 0.0
          %298 = vst.msk [vmem:[#allocation3 + $0x10] sm:$0xff] %vm291, 0.0
          %299 = vst.msk [vmem:[#allocation3 + $0x18] sm:$0xff] %vm291, 0.0
          %300 = vst [vmem:[#allocation4] sm:$0xff] 0.0
        $region48: #{tpu_custom_call.1} parent=31 // pred_fallthru
          _
        %s301 = smul.u32 %s30, 8
        %s302 = smul.u32 %s29, 8
        %s303 = sadd.s32 %s302, 7
        %p304 = scmp.le.s32.totalorder %s301, %s303
        // Predicated region
        $region49: #{tpu_custom_call.1} parent=31 // pred_check
          %p305 = pneg %p304
        $region50: #{tpu_custom_call.1} parent=31 // pred_check_branch
          %307 = sbr.rel (%p305) target = $region52
        $region51: #{tpu_custom_call.1} parent=31 // pred_region
          %v308 = vld [vmem:[%s236] sm:$0xff]
          %v309 = vmul.f32 %v308, 0.17677669
          %v310 = vld [vmem:[%s245] sm:$0xff]
          %v311 = vld [vmem:[%s254] sm:$0xff]
          %v312 = vlaneseq
          %v313 = vshrl.u32 %v312, 7
          %v314 = vstv %s302
          %v315 = vadd.s32 %v314, %v313
          %v316 = vlaneseq
          %v317 = vand.u32 %v316, 127
          %v318 = vstv %s301
          %v319 = vadd.s32 %v318, %v317
          %vm320 = vcmp.gt.s32.totalorder %v319, %v315
          %vm321 = vcmask 261120
          %v323 = vsel %vm321, %v309, 0
          %v326 = vsel %vm321, %v310, 0
          %328 = vmatprep.subr.mxu0 0.0
          %329 = vmatpush1.xpose.msra.mxu0 0.0
          %330 = vmatprep.subr.mxu0 0.0
          %331 = vmatpush1.xpose.msra.mxu0 0.0
          %332 = vmatprep.subr.mxu0 0.0
          %333 = vmatpush1.xpose.msra.mxu0 0.0
          %334 = vmatprep.subr.mxu0 0.0
          %335 = vmatpush1.xpose.msra.mxu0 0.0
          %336 = vmatprep.subr.mxu0 0.0
          %337 = vmatpush1.xpose.msra.mxu0 0.0
          %338 = vmatprep.subr.mxu0 0.0
          %339 = vmatpush1.xpose.msra.mxu0 0.0
          %340 = vmatprep.subr.mxu0 0.0
          %341 = vmatpush1.xpose.msra.mxu0 0.0
          %342 = vmatprep.subr.mxu0 0.0
          %343 = vmatpush1.xpose.msra.mxu0 0.0
          %344 = vmatprep.subr.mxu0 0.0
          %345 = vmatpush1.xpose.msra.mxu0 0.0
          %346 = vmatprep.subr.mxu0 0.0
          %347 = vmatpush1.xpose.msra.mxu0 0.0
          %348 = vmatprep.subr.mxu0 0.0
          %349 = vmatpush1.xpose.msra.mxu0 0.0
          %350 = vmatprep.subr.mxu0 0.0
          %351 = vmatpush1.xpose.msra.mxu0 0.0
          %352 = vmatprep.subr.mxu0 0.0
          %353 = vmatpush1.xpose.msra.mxu0 0.0
          %354 = vmatprep.subr.mxu0 0.0
          %355 = vmatpush1.xpose.msra.mxu0 0.0
          %356 = vmatprep.subr.mxu0 0.0
          %357 = vmatpush1.xpose.msra.mxu0 0.0
          %358 = vmatprep.subr.mxu0 0.0
          %359 = vmatpush1.xpose.msra.mxu0 %v326
          %360 = vmatprep.subr.mxu0 0.0
          %361 = vmatpush2.xpose.msra.mxu0 0.0
          %362 = vmatprep.subr.mxu0 0.0
          %363 = vmatpush2.xpose.msra.mxu0 0.0
          %364 = vmatprep.subr.mxu0 0.0
          %365 = vmatpush2.xpose.msra.mxu0 0.0
          %366 = vmatprep.subr.mxu0 0.0
          %367 = vmatpush2.xpose.msra.mxu0 0.0
          %368 = vmatprep.subr.mxu0 0.0
          %369 = vmatpush2.xpose.msra.mxu0 0.0
          %370 = vmatprep.subr.mxu0 0.0
          %371 = vmatpush2.xpose.msra.mxu0 0.0
          %372 = vmatprep.subr.mxu0 0.0
          %373 = vmatpush2.xpose.msra.mxu0 0.0
          %374 = vmatprep.subr.mxu0 0.0
          %375 = vmatpush2.xpose.msra.mxu0 0.0
          %376 = vmatprep.subr.mxu0 0.0
          %377 = vmatpush2.xpose.msra.mxu0 0.0
          %378 = vmatprep.subr.mxu0 0.0
          %379 = vmatpush2.xpose.msra.mxu0 0.0
          %380 = vmatprep.subr.mxu0 0.0
          %381 = vmatpush2.xpose.msra.mxu0 0.0
          %382 = vmatprep.subr.mxu0 0.0
          %383 = vmatpush2.xpose.msra.mxu0 0.0
          %384 = vmatprep.subr.mxu0 0.0
          %385 = vmatpush2.xpose.msra.mxu0 0.0
          %386 = vmatprep.subr.mxu0 0.0
          %387 = vmatpush2.xpose.msra.mxu0 0.0
          %388 = vmatprep.subr.mxu0 0.0
          %389 = vmatpush2.xpose.msra.mxu0 0.0
          %390 = vmatprep.subr.mxu0 0.0
          %391 = vmatpush2.xpose.msra.mxu0 0.0
          %392 = vmatprep.mubr.f32.mxu0 0.0
          %393 = vmatmul.mubr.f32.gmra.mxu0 %v323
          %v394 = vpop.f32.mrf.mxu0
          %v395 = vadd.f32 0.0, %v394
          %v396 = vpop.f32.mrf.mxu0
          %397 = vdwg.mxu0
          %v398 = vsel %vm320, -2.3819763e+38, %v395
          %v399 = vld [vmem:[#allocation2] sm:$0xff]
          %vm400 = vcmask 64512
          %v401 = vsel %vm400, %v398, -inf
          %402 = vmax.xlane.f32.xlu0 %v401
          %v403 = vpop.xlane.xlu0 %402
          %v404 = vmax.f32 %v399, %v403
          %v405 = vsub.f32 %v399, %v404
          %v406 = vmul.f32 %v405, 1.442695
          %v407 = vpow.pop %v406
          %409 = vset.pattern.permute.xlu0 0
          %410 = vperm.xlu0 %409, %v404
          %v411 = vpop.permute.xlu0 %410
          %v413 = vsub.f32 %v398, %v411
          %v414 = vmul.f32 %v413, 1.442695
          %v415 = vpow.pop %v414
          %v416 = vld [vmem:[#allocation3] sm:$0xff]
          %v417 = vmul.f32 %v407, %v416
          %v418 = vsel %vm400, %v415, 0.0
          %419 = vadd.xlane.f32.xlu0 %v418
          %v420 = vpop.xlane.xlu0 %419
          %v421 = vadd.f32 %v417, %v420
          %vm422 = vcmask 7168
          %423 = vst.msk [vmem:[#allocation3] sm:$0xff] %vm422, %v421
          %424 = vst.msk [vmem:[#allocation2] sm:$0xff] %vm422, %v404
          %v426 = vsel %vm400, %v415, 0
          %428 = vmatprep.subr.mxu0 0.0
          %429 = vmatpush1.msra.mxu0 0.0
          %430 = vmatprep.subr.mxu0 0.0
          %431 = vmatpush1.msra.mxu0 0.0
          %432 = vmatprep.subr.mxu0 0.0
          %433 = vmatpush1.msra.mxu0 0.0
          %434 = vmatprep.subr.mxu0 0.0
          %435 = vmatpush1.msra.mxu0 0.0
          %436 = vmatprep.subr.mxu0 0.0
          %437 = vmatpush1.msra.mxu0 0.0
          %438 = vmatprep.subr.mxu0 0.0
          %439 = vmatpush1.msra.mxu0 0.0
          %440 = vmatprep.subr.mxu0 0.0
          %441 = vmatpush1.msra.mxu0 0.0
          %442 = vmatprep.subr.mxu0 0.0
          %443 = vmatpush1.msra.mxu0 0.0
          %444 = vmatprep.subr.mxu0 0.0
          %445 = vmatpush1.msra.mxu0 0.0
          %446 = vmatprep.subr.mxu0 0.0
          %447 = vmatpush1.msra.mxu0 0.0
          %448 = vmatprep.subr.mxu0 0.0
          %449 = vmatpush1.msra.mxu0 0.0
          %450 = vmatprep.subr.mxu0 0.0
          %451 = vmatpush1.msra.mxu0 0.0
          %452 = vmatprep.subr.mxu0 0.0
          %453 = vmatpush1.msra.mxu0 0.0
          %454 = vmatprep.subr.mxu0 0.0
          %455 = vmatpush1.msra.mxu0 0.0
          %456 = vmatprep.subr.mxu0 0.0
          %457 = vmatpush1.msra.mxu0 0.0
          %458 = vmatprep.subr.mxu0 0.0
          %459 = vmatpush1.msra.mxu0 %v311
          %460 = vmatprep.subr.mxu0 0.0
          %461 = vmatpush2.msra.mxu0 0.0
          %462 = vmatprep.subr.mxu0 0.0
          %463 = vmatpush2.msra.mxu0 0.0
          %464 = vmatprep.subr.mxu0 0.0
          %465 = vmatpush2.msra.mxu0 0.0
          %466 = vmatprep.subr.mxu0 0.0
          %467 = vmatpush2.msra.mxu0 0.0
          %468 = vmatprep.subr.mxu0 0.0
          %469 = vmatpush2.msra.mxu0 0.0
          %470 = vmatprep.subr.mxu0 0.0
          %471 = vmatpush2.msra.mxu0 0.0
          %472 = vmatprep.subr.mxu0 0.0
          %473 = vmatpush2.msra.mxu0 0.0
          %474 = vmatprep.subr.mxu0 0.0
          %475 = vmatpush2.msra.mxu0 0.0
          %476 = vmatprep.subr.mxu0 0.0
          %477 = vmatpush2.msra.mxu0 0.0
          %478 = vmatprep.subr.mxu0 0.0
          %479 = vmatpush2.msra.mxu0 0.0
          %480 = vmatprep.subr.mxu0 0.0
          %481 = vmatpush2.msra.mxu0 0.0
          %482 = vmatprep.subr.mxu0 0.0
          %483 = vmatpush2.msra.mxu0 0.0
          %484 = vmatprep.subr.mxu0 0.0
          %485 = vmatpush2.msra.mxu0 0.0
          %486 = vmatprep.subr.mxu0 0.0
          %487 = vmatpush2.msra.mxu0 0.0
          %488 = vmatprep.subr.mxu0 0.0
          %489 = vmatpush2.msra.mxu0 0.0
          %490 = vmatprep.subr.mxu0 0.0
          %491 = vmatpush2.msra.mxu0 0.0
          %492 = vmatprep.mubr.f32.mxu0 0.0
          %493 = vmatmul.mubr.f32.gmra.mxu0 %v426
          %v494 = vpop.f32.mrf.mxu0
          %v495 = vadd.f32 0.0, %v494
          %v496 = vpop.f32.mrf.mxu0
          %497 = vdwg.mxu0
          %v498 = vld [vmem:[#allocation4] sm:$0xff]
          %500 = vset.pattern.permute.xlu0 0
          %501 = vperm.xlu0 %500, %v407
          %v502 = vpop.permute.xlu0 %501
          %v504 = vmul.f32 %v502, %v498
          %v505 = vadd.f32 %v504, %v495
          %506 = vst.msk [vmem:[#allocation4] sm:$0xff] %vm321, %v505
          %507 = vrot.lane.b32.xlu0 %v309, 96
          %v508 = vpop.permute.xlu0 %507
          %509 = vrot.lane.b32.xlu0 %v310, 96
          %v510 = vpop.permute.xlu0 %509
          %v511 = vsel %vm321, %v508, 0
          %v513 = vsel %vm321, %v510, 0
          %515 = vmatprep.subr.mxu0 0.0
          %516 = vmatpush1.xpose.msra.mxu0 0.0
          %517 = vmatprep.subr.mxu0 0.0
          %518 = vmatpush1.xpose.msra.mxu0 0.0
          %519 = vmatprep.subr.mxu0 0.0
          %520 = vmatpush1.xpose.msra.mxu0 0.0
          %521 = vmatprep.subr.mxu0 0.0
          %522 = vmatpush1.xpose.msra.mxu0 0.0
          %523 = vmatprep.subr.mxu0 0.0
          %524 = vmatpush1.xpose.msra.mxu0 0.0
          %525 = vmatprep.subr.mxu0 0.0
          %526 = vmatpush1.xpose.msra.mxu0 0.0
          %527 = vmatprep.subr.mxu0 0.0
          %528 = vmatpush1.xpose.msra.mxu0 0.0
          %529 = vmatprep.subr.mxu0 0.0
          %530 = vmatpush1.xpose.msra.mxu0 0.0
          %531 = vmatprep.subr.mxu0 0.0
          %532 = vmatpush1.xpose.msra.mxu0 0.0
          %533 = vmatprep.subr.mxu0 0.0
          %534 = vmatpush1.xpose.msra.mxu0 0.0
          %535 = vmatprep.subr.mxu0 0.0
          %536 = vmatpush1.xpose.msra.mxu0 0.0
          %537 = vmatprep.subr.mxu0 0.0
          %538 = vmatpush1.xpose.msra.mxu0 0.0
          %539 = vmatprep.subr.mxu0 0.0
          %540 = vmatpush1.xpose.msra.mxu0 0.0
          %541 = vmatprep.subr.mxu0 0.0
          %542 = vmatpush1.xpose.msra.mxu0 0.0
          %543 = vmatprep.subr.mxu0 0.0
          %544 = vmatpush1.xpose.msra.mxu0 0.0
          %545 = vmatprep.subr.mxu0 0.0
          %546 = vmatpush1.xpose.msra.mxu0 %v513
          %547 = vmatprep.subr.mxu0 0.0
          %548 = vmatpush2.xpose.msra.mxu0 0.0
          %549 = vmatprep.subr.mxu0 0.0
          %550 = vmatpush2.xpose.msra.mxu0 0.0
          %551 = vmatprep.subr.mxu0 0.0
          %552 = vmatpush2.xpose.msra.mxu0 0.0
          %553 = vmatprep.subr.mxu0 0.0
          %554 = vmatpush2.xpose.msra.mxu0 0.0
          %555 = vmatprep.subr.mxu0 0.0
          %556 = vmatpush2.xpose.msra.mxu0 0.0
          %557 = vmatprep.subr.mxu0 0.0
          %558 = vmatpush2.xpose.msra.mxu0 0.0
          %559 = vmatprep.subr.mxu0 0.0
          %560 = vmatpush2.xpose.msra.mxu0 0.0
          %561 = vmatprep.subr.mxu0 0.0
          %562 = vmatpush2.xpose.msra.mxu0 0.0
          %563 = vmatprep.subr.mxu0 0.0
          %564 = vmatpush2.xpose.msra.mxu0 0.0
          %565 = vmatprep.subr.mxu0 0.0
          %566 = vmatpush2.xpose.msra.mxu0 0.0
          %567 = vmatprep.subr.mxu0 0.0
          %568 = vmatpush2.xpose.msra.mxu0 0.0
          %569 = vmatprep.subr.mxu0 0.0
          %570 = vmatpush2.xpose.msra.mxu0 0.0
          %571 = vmatprep.subr.mxu0 0.0
          %572 = vmatpush2.xpose.msra.mxu0 0.0
          %573 = vmatprep.subr.mxu0 0.0
          %574 = vmatpush2.xpose.msra.mxu0 0.0
          %575 = vmatprep.subr.mxu0 0.0
          %576 = vmatpush2.xpose.msra.mxu0 0.0
          %577 = vmatprep.subr.mxu0 0.0
          %578 = vmatpush2.xpose.msra.mxu0 0.0
          %579 = vmatprep.mubr.f32.mxu0 0.0
          %580 = vmatmul.mubr.f32.gmra.mxu0 %v511
          %v581 = vpop.f32.mrf.mxu0
          %v582 = vadd.f32 0.0, %v581
          %v583 = vpop.f32.mrf.mxu0
          %584 = vdwg.mxu0
          %v585 = vsel %vm320, -2.3819763e+38, %v582
          %s586 = scalar_lea.vmem [#allocation2], 8
          %v587 = vld [vmem:[%s586] sm:$0xff]
          %v588 = vsel %vm400, %v585, -inf
          %589 = vmax.xlane.f32.xlu0 %v588
          %v590 = vpop.xlane.xlu0 %589
          %v591 = vmax.f32 %v587, %v590
          %v592 = vsub.f32 %v587, %v591
          %v593 = vmul.f32 %v592, 1.442695
          %v594 = vpow.pop %v593
          %596 = vset.pattern.permute.xlu0 0
          %597 = vperm.xlu0 %596, %v591
          %v598 = vpop.permute.xlu0 %597
          %v600 = vsub.f32 %v585, %v598
          %v601 = vmul.f32 %v600, 1.442695
          %v602 = vpow.pop %v601
          %s603 = scalar_lea.vmem [#allocation3], 8
          %v604 = vld [vmem:[%s603] sm:$0xff]
          %v605 = vmul.f32 %v594, %v604
          %v606 = vsel %vm400, %v602, 0.0
          %607 = vadd.xlane.f32.xlu0 %v606
          %v608 = vpop.xlane.xlu0 %607
          %v609 = vadd.f32 %v605, %v608
          %610 = vst.msk [vmem:[%s603] sm:$0xff] %vm422, %v609
          %611 = vst.msk [vmem:[%s586] sm:$0xff] %vm422, %v591
          %613 = vrot.lane.b32.xlu0 %v311, 96
          %v614 = vpop.permute.xlu0 %613
          %v617 = vsel %vm400, %v602, 0
          %619 = vmatprep.subr.mxu0 0.0
          %620 = vmatpush1.msra.mxu0 0.0
          %621 = vmatprep.subr.mxu0 0.0
          %622 = vmatpush1.msra.mxu0 0.0
          %623 = vmatprep.subr.mxu0 0.0
          %624 = vmatpush1.msra.mxu0 0.0
          %625 = vmatprep.subr.mxu0 0.0
          %626 = vmatpush1.msra.mxu0 0.0
          %627 = vmatprep.subr.mxu0 0.0
          %628 = vmatpush1.msra.mxu0 0.0
          %629 = vmatprep.subr.mxu0 0.0
          %630 = vmatpush1.msra.mxu0 0.0
          %631 = vmatprep.subr.mxu0 0.0
          %632 = vmatpush1.msra.mxu0 0.0
          %633 = vmatprep.subr.mxu0 0.0
          %634 = vmatpush1.msra.mxu0 0.0
          %635 = vmatprep.subr.mxu0 0.0
          %636 = vmatpush1.msra.mxu0 0.0
          %637 = vmatprep.subr.mxu0 0.0
          %638 = vmatpush1.msra.mxu0 0.0
          %639 = vmatprep.subr.mxu0 0.0
          %640 = vmatpush1.msra.mxu0 0.0
          %641 = vmatprep.subr.mxu0 0.0
          %642 = vmatpush1.msra.mxu0 0.0
          %643 = vmatprep.subr.mxu0 0.0
          %644 = vmatpush1.msra.mxu0 0.0
          %645 = vmatprep.subr.mxu0 0.0
          %646 = vmatpush1.msra.mxu0 0.0
          %647 = vmatprep.subr.mxu0 0.0
          %648 = vmatpush1.msra.mxu0 0.0
          %649 = vmatprep.subr.mxu0 0.0
          %650 = vmatpush1.msra.mxu0 %v614
          %651 = vmatprep.subr.mxu0 0.0
          %652 = vmatpush2.msra.mxu0 0.0
          %653 = vmatprep.subr.mxu0 0.0
          %654 = vmatpush2.msra.mxu0 0.0
          %655 = vmatprep.subr.mxu0 0.0
          %656 = vmatpush2.msra.mxu0 0.0
          %657 = vmatprep.subr.mxu0 0.0
          %658 = vmatpush2.msra.mxu0 0.0
          %659 = vmatprep.subr.mxu0 0.0
          %660 = vmatpush2.msra.mxu0 0.0
          %661 = vmatprep.subr.mxu0 0.0
          %662 = vmatpush2.msra.mxu0 0.0
          %663 = vmatprep.subr.mxu0 0.0
          %664 = vmatpush2.msra.mxu0 0.0
          %665 = vmatprep.subr.mxu0 0.0
          %666 = vmatpush2.msra.mxu0 0.0
          %667 = vmatprep.subr.mxu0 0.0
          %668 = vmatpush2.msra.mxu0 0.0
          %669 = vmatprep.subr.mxu0 0.0
          %670 = vmatpush2.msra.mxu0 0.0
          %671 = vmatprep.subr.mxu0 0.0
          %672 = vmatpush2.msra.mxu0 0.0
          %673 = vmatprep.subr.mxu0 0.0
          %674 = vmatpush2.msra.mxu0 0.0
          %675 = vmatprep.subr.mxu0 0.0
          %676 = vmatpush2.msra.mxu0 0.0
          %677 = vmatprep.subr.mxu0 0.0
          %678 = vmatpush2.msra.mxu0 0.0
          %679 = vmatprep.subr.mxu0 0.0
          %680 = vmatpush2.msra.mxu0 0.0
          %681 = vmatprep.subr.mxu0 0.0
          %682 = vmatpush2.msra.mxu0 0.0
          %683 = vmatprep.mubr.f32.mxu0 0.0
          %684 = vmatmul.mubr.f32.gmra.mxu0 %v617
          %v685 = vpop.f32.mrf.mxu0
          %v686 = vadd.f32 0.0, %v685
          %v687 = vpop.f32.mrf.mxu0
          %688 = vdwg.mxu0
          %v689 = vld [vmem:[#allocation4] sm:$0xff]
          %691 = vset.pattern.permute.xlu0 0
          %692 = vperm.xlu0 %691, %v594
          %v693 = vpop.permute.xlu0 %692
          %v695 = vmul.f32 %v693, %v689
          %697 = vrot.lane.b32.xlu0 %v686, 32
          %v698 = vpop.permute.xlu0 %697
          %v700 = vadd.f32 %v695, %v698
          %vm701 = vcmask 523520
          %702 = vst.msk [vmem:[#allocation4] sm:$0xff] %vm701, %v700
          %703 = vrot.lane.b32.xlu0 %v309, 64
          %v704 = vpop.permute.xlu0 %703
          %705 = vrot.lane.b32.xlu0 %v310, 64
          %v706 = vpop.permute.xlu0 %705
          %v707 = vsel %vm321, %v704, 0
          %v709 = vsel %vm321, %v706, 0
          %711 = vmatprep.subr.mxu0 0.0
          %712 = vmatpush1.xpose.msra.mxu0 0.0
          %713 = vmatprep.subr.mxu0 0.0
          %714 = vmatpush1.xpose.msra.mxu0 0.0
          %715 = vmatprep.subr.mxu0 0.0
          %716 = vmatpush1.xpose.msra.mxu0 0.0
          %717 = vmatprep.subr.mxu0 0.0
          %718 = vmatpush1.xpose.msra.mxu0 0.0
          %719 = vmatprep.subr.mxu0 0.0
          %720 = vmatpush1.xpose.msra.mxu0 0.0
          %721 = vmatprep.subr.mxu0 0.0
          %722 = vmatpush1.xpose.msra.mxu0 0.0
          %723 = vmatprep.subr.mxu0 0.0
          %724 = vmatpush1.xpose.msra.mxu0 0.0
          %725 = vmatprep.subr.mxu0 0.0
          %726 = vmatpush1.xpose.msra.mxu0 0.0
          %727 = vmatprep.subr.mxu0 0.0
          %728 = vmatpush1.xpose.msra.mxu0 0.0
          %729 = vmatprep.subr.mxu0 0.0
          %730 = vmatpush1.xpose.msra.mxu0 0.0
          %731 = vmatprep.subr.mxu0 0.0
          %732 = vmatpush1.xpose.msra.mxu0 0.0
          %733 = vmatprep.subr.mxu0 0.0
          %734 = vmatpush1.xpose.msra.mxu0 0.0
          %735 = vmatprep.subr.mxu0 0.0
          %736 = vmatpush1.xpose.msra.mxu0 0.0
          %737 = vmatprep.subr.mxu0 0.0
          %738 = vmatpush1.xpose.msra.mxu0 0.0
          %739 = vmatprep.subr.mxu0 0.0
          %740 = vmatpush1.xpose.msra.mxu0 0.0
          %741 = vmatprep.subr.mxu0 0.0
          %742 = vmatpush1.xpose.msra.mxu0 %v709
          %743 = vmatprep.subr.mxu0 0.0
          %744 = vmatpush2.xpose.msra.mxu0 0.0
          %745 = vmatprep.subr.mxu0 0.0
          %746 = vmatpush2.xpose.msra.mxu0 0.0
          %747 = vmatprep.subr.mxu0 0.0
          %748 = vmatpush2.xpose.msra.mxu0 0.0
          %749 = vmatprep.subr.mxu0 0.0
          %750 = vmatpush2.xpose.msra.mxu0 0.0
          %751 = vmatprep.subr.mxu0 0.0
          %752 = vmatpush2.xpose.msra.mxu0 0.0
          %753 = vmatprep.subr.mxu0 0.0
          %754 = vmatpush2.xpose.msra.mxu0 0.0
          %755 = vmatprep.subr.mxu0 0.0
          %756 = vmatpush2.xpose.msra.mxu0 0.0
          %757 = vmatprep.subr.mxu0 0.0
          %758 = vmatpush2.xpose.msra.mxu0 0.0
          %759 = vmatprep.subr.mxu0 0.0
          %760 = vmatpush2.xpose.msra.mxu0 0.0
          %761 = vmatprep.subr.mxu0 0.0
          %762 = vmatpush2.xpose.msra.mxu0 0.0
          %763 = vmatprep.subr.mxu0 0.0
          %764 = vmatpush2.xpose.msra.mxu0 0.0
          %765 = vmatprep.subr.mxu0 0.0
          %766 = vmatpush2.xpose.msra.mxu0 0.0
          %767 = vmatprep.subr.mxu0 0.0
          %768 = vmatpush2.xpose.msra.mxu0 0.0
          %769 = vmatprep.subr.mxu0 0.0
          %770 = vmatpush2.xpose.msra.mxu0 0.0
          %771 = vmatprep.subr.mxu0 0.0
          %772 = vmatpush2.xpose.msra.mxu0 0.0
          %773 = vmatprep.subr.mxu0 0.0
          %774 = vmatpush2.xpose.msra.mxu0 0.0
          %775 = vmatprep.mubr.f32.mxu0 0.0
          %776 = vmatmul.mubr.f32.gmra.mxu0 %v707
          %v777 = vpop.f32.mrf.mxu0
          %v778 = vadd.f32 0.0, %v777
          %v779 = vpop.f32.mrf.mxu0
          %780 = vdwg.mxu0
          %v781 = vsel %vm320, -2.3819763e+38, %v778
          %s782 = scalar_lea.vmem [#allocation2], 16
          %v783 = vld [vmem:[%s782] sm:$0xff]
          %v784 = vsel %vm400, %v781, -inf
          %785 = vmax.xlane.f32.xlu0 %v784
          %v786 = vpop.xlane.xlu0 %785
          %v787 = vmax.f32 %v783, %v786
          %v788 = vsub.f32 %v783, %v787
          %v789 = vmul.f32 %v788, 1.442695
          %v790 = vpow.pop %v789
          %792 = vset.pattern.permute.xlu0 0
          %793 = vperm.xlu0 %792, %v787
          %v794 = vpop.permute.xlu0 %793
          %v796 = vsub.f32 %v781, %v794
          %v797 = vmul.f32 %v796, 1.442695
          %v798 = vpow.pop %v797
          %s799 = scalar_lea.vmem [#allocation3], 16
          %v800 = vld [vmem:[%s799] sm:$0xff]
          %v801 = vmul.f32 %v790, %v800
          %v802 = vsel %vm400, %v798, 0.0
          %803 = vadd.xlane.f32.xlu0 %v802
          %v804 = vpop.xlane.xlu0 %803
          %v805 = vadd.f32 %v801, %v804
          %806 = vst.msk [vmem:[%s799] sm:$0xff] %vm422, %v805
          %807 = vst.msk [vmem:[%s782] sm:$0xff] %vm422, %v787
          %808 = vrot.lane.b32.xlu0 %v311, 64
          %v809 = vpop.permute.xlu0 %808
          %v812 = vsel %vm400, %v798, 0
          %814 = vmatprep.subr.mxu0 0.0
          %815 = vmatpush1.msra.mxu0 0.0
          %816 = vmatprep.subr.mxu0 0.0
          %817 = vmatpush1.msra.mxu0 0.0
          %818 = vmatprep.subr.mxu0 0.0
          %819 = vmatpush1.msra.mxu0 0.0
          %820 = vmatprep.subr.mxu0 0.0
          %821 = vmatpush1.msra.mxu0 0.0
          %822 = vmatprep.subr.mxu0 0.0
          %823 = vmatpush1.msra.mxu0 0.0
          %824 = vmatprep.subr.mxu0 0.0
          %825 = vmatpush1.msra.mxu0 0.0
          %826 = vmatprep.subr.mxu0 0.0
          %827 = vmatpush1.msra.mxu0 0.0
          %828 = vmatprep.subr.mxu0 0.0
          %829 = vmatpush1.msra.mxu0 0.0
          %830 = vmatprep.subr.mxu0 0.0
          %831 = vmatpush1.msra.mxu0 0.0
          %832 = vmatprep.subr.mxu0 0.0
          %833 = vmatpush1.msra.mxu0 0.0
          %834 = vmatprep.subr.mxu0 0.0
          %835 = vmatpush1.msra.mxu0 0.0
          %836 = vmatprep.subr.mxu0 0.0
          %837 = vmatpush1.msra.mxu0 0.0
          %838 = vmatprep.subr.mxu0 0.0
          %839 = vmatpush1.msra.mxu0 0.0
          %840 = vmatprep.subr.mxu0 0.0
          %841 = vmatpush1.msra.mxu0 0.0
          %842 = vmatprep.subr.mxu0 0.0
          %843 = vmatpush1.msra.mxu0 0.0
          %844 = vmatprep.subr.mxu0 0.0
          %845 = vmatpush1.msra.mxu0 %v809
          %846 = vmatprep.subr.mxu0 0.0
          %847 = vmatpush2.msra.mxu0 0.0
          %848 = vmatprep.subr.mxu0 0.0
          %849 = vmatpush2.msra.mxu0 0.0
          %850 = vmatprep.subr.mxu0 0.0
          %851 = vmatpush2.msra.mxu0 0.0
          %852 = vmatprep.subr.mxu0 0.0
          %853 = vmatpush2.msra.mxu0 0.0
          %854 = vmatprep.subr.mxu0 0.0
          %855 = vmatpush2.msra.mxu0 0.0
          %856 = vmatprep.subr.mxu0 0.0
          %857 = vmatpush2.msra.mxu0 0.0
          %858 = vmatprep.subr.mxu0 0.0
          %859 = vmatpush2.msra.mxu0 0.0
          %860 = vmatprep.subr.mxu0 0.0
          %861 = vmatpush2.msra.mxu0 0.0
          %862 = vmatprep.subr.mxu0 0.0
          %863 = vmatpush2.msra.mxu0 0.0
          %864 = vmatprep.subr.mxu0 0.0
          %865 = vmatpush2.msra.mxu0 0.0
          %866 = vmatprep.subr.mxu0 0.0
          %867 = vmatpush2.msra.mxu0 0.0
          %868 = vmatprep.subr.mxu0 0.0
          %869 = vmatpush2.msra.mxu0 0.0
          %870 = vmatprep.subr.mxu0 0.0
          %871 = vmatpush2.msra.mxu0 0.0
          %872 = vmatprep.subr.mxu0 0.0
          %873 = vmatpush2.msra.mxu0 0.0
          %874 = vmatprep.subr.mxu0 0.0
          %875 = vmatpush2.msra.mxu0 0.0
          %876 = vmatprep.subr.mxu0 0.0
          %877 = vmatpush2.msra.mxu0 0.0
          %878 = vmatprep.mubr.f32.mxu0 0.0
          %879 = vmatmul.mubr.f32.gmra.mxu0 %v812
          %v880 = vpop.f32.mrf.mxu0
          %v881 = vadd.f32 0.0, %v880
          %v882 = vpop.f32.mrf.mxu0
          %883 = vdwg.mxu0
          %v884 = vld [vmem:[#allocation4] sm:$0xff]
          %886 = vset.pattern.permute.xlu0 0
          %887 = vperm.xlu0 %886, %v790
          %v888 = vpop.permute.xlu0 %887
          %v890 = vmul.f32 %v888, %v884
          %892 = vrot.lane.b32.xlu0 %v881, 64
          %v893 = vpop.permute.xlu0 %892
          %v895 = vadd.f32 %v890, %v893
          %vm896 = vcmask 785920
          %897 = vst.msk [vmem:[#allocation4] sm:$0xff] %vm896, %v895
          %898 = vrot.lane.b32.xlu0 %v309, 32
          %v899 = vpop.permute.xlu0 %898
          %900 = vrot.lane.b32.xlu0 %v310, 32
          %v901 = vpop.permute.xlu0 %900
          %v902 = vsel %vm321, %v899, 0
          %v904 = vsel %vm321, %v901, 0
          %906 = vmatprep.subr.mxu0 0.0
          %907 = vmatpush1.xpose.msra.mxu0 0.0
          %908 = vmatprep.subr.mxu0 0.0
          %909 = vmatpush1.xpose.msra.mxu0 0.0
          %910 = vmatprep.subr.mxu0 0.0
          %911 = vmatpush1.xpose.msra.mxu0 0.0
          %912 = vmatprep.subr.mxu0 0.0
          %913 = vmatpush1.xpose.msra.mxu0 0.0
          %914 = vmatprep.subr.mxu0 0.0
          %915 = vmatpush1.xpose.msra.mxu0 0.0
          %916 = vmatprep.subr.mxu0 0.0
          %917 = vmatpush1.xpose.msra.mxu0 0.0
          %918 = vmatprep.subr.mxu0 0.0
          %919 = vmatpush1.xpose.msra.mxu0 0.0
          %920 = vmatprep.subr.mxu0 0.0
          %921 = vmatpush1.xpose.msra.mxu0 0.0
          %922 = vmatprep.subr.mxu0 0.0
          %923 = vmatpush1.xpose.msra.mxu0 0.0
          %924 = vmatprep.subr.mxu0 0.0
          %925 = vmatpush1.xpose.msra.mxu0 0.0
          %926 = vmatprep.subr.mxu0 0.0
          %927 = vmatpush1.xpose.msra.mxu0 0.0
          %928 = vmatprep.subr.mxu0 0.0
          %929 = vmatpush1.xpose.msra.mxu0 0.0
          %930 = vmatprep.subr.mxu0 0.0
          %931 = vmatpush1.xpose.msra.mxu0 0.0
          %932 = vmatprep.subr.mxu0 0.0
          %933 = vmatpush1.xpose.msra.mxu0 0.0
          %934 = vmatprep.subr.mxu0 0.0
          %935 = vmatpush1.xpose.msra.mxu0 0.0
          %936 = vmatprep.subr.mxu0 0.0
          %937 = vmatpush1.xpose.msra.mxu0 %v904
          %938 = vmatprep.subr.mxu0 0.0
          %939 = vmatpush2.xpose.msra.mxu0 0.0
          %940 = vmatprep.subr.mxu0 0.0
          %941 = vmatpush2.xpose.msra.mxu0 0.0
          %942 = vmatprep.subr.mxu0 0.0
          %943 = vmatpush2.xpose.msra.mxu0 0.0
          %944 = vmatprep.subr.mxu0 0.0
          %945 = vmatpush2.xpose.msra.mxu0 0.0
          %946 = vmatprep.subr.mxu0 0.0
          %947 = vmatpush2.xpose.msra.mxu0 0.0
          %948 = vmatprep.subr.mxu0 0.0
          %949 = vmatpush2.xpose.msra.mxu0 0.0
          %950 = vmatprep.subr.mxu0 0.0
          %951 = vmatpush2.xpose.msra.mxu0 0.0
          %952 = vmatprep.subr.mxu0 0.0
          %953 = vmatpush2.xpose.msra.mxu0 0.0
          %954 = vmatprep.subr.mxu0 0.0
          %955 = vmatpush2.xpose.msra.mxu0 0.0
          %956 = vmatprep.subr.mxu0 0.0
          %957 = vmatpush2.xpose.msra.mxu0 0.0
          %958 = vmatprep.subr.mxu0 0.0
          %959 = vmatpush2.xpose.msra.mxu0 0.0
          %960 = vmatprep.subr.mxu0 0.0
          %961 = vmatpush2.xpose.msra.mxu0 0.0
          %962 = vmatprep.subr.mxu0 0.0
          %963 = vmatpush2.xpose.msra.mxu0 0.0
          %964 = vmatprep.subr.mxu0 0.0
          %965 = vmatpush2.xpose.msra.mxu0 0.0
          %966 = vmatprep.subr.mxu0 0.0
          %967 = vmatpush2.xpose.msra.mxu0 0.0
          %968 = vmatprep.subr.mxu0 0.0
          %969 = vmatpush2.xpose.msra.mxu0 0.0
          %970 = vmatprep.mubr.f32.mxu0 0.0
          %971 = vmatmul.mubr.f32.gmra.mxu0 %v902
          %v972 = vpop.f32.mrf.mxu0
          %v973 = vadd.f32 0.0, %v972
          %v974 = vpop.f32.mrf.mxu0
          %975 = vdwg.mxu0
          %v976 = vsel %vm320, -2.3819763e+38, %v973
          %s977 = scalar_lea.vmem [#allocation2], 24
          %v978 = vld [vmem:[%s977] sm:$0xff]
          %v979 = vsel %vm400, %v976, -inf
          %980 = vmax.xlane.f32.xlu0 %v979
          %v981 = vpop.xlane.xlu0 %980
          %v982 = vmax.f32 %v978, %v981
          %v983 = vsub.f32 %v978, %v982
          %v984 = vmul.f32 %v983, 1.442695
          %v985 = vpow.pop %v984
          %987 = vset.pattern.permute.xlu0 0
          %988 = vperm.xlu0 %987, %v982
          %v989 = vpop.permute.xlu0 %988
          %v991 = vsub.f32 %v976, %v989
          %v992 = vmul.f32 %v991, 1.442695
          %v993 = vpow.pop %v992
          %s994 = scalar_lea.vmem [#allocation3], 24
          %v995 = vld [vmem:[%s994] sm:$0xff]
          %v996 = vmul.f32 %v985, %v995
          %v997 = vsel %vm400, %v993, 0.0
          %998 = vadd.xlane.f32.xlu0 %v997
          %v999 = vpop.xlane.xlu0 %998
          %v1000 = vadd.f32 %v996, %v999
          %1001 = vst.msk [vmem:[%s994] sm:$0xff] %vm422, %v1000
          %1002 = vst.msk [vmem:[%s977] sm:$0xff] %vm422, %v982
          %1003 = vrot.lane.b32.xlu0 %v311, 32
          %v1004 = vpop.permute.xlu0 %1003
          %v1007 = vsel %vm400, %v993, 0
          %1009 = vmatprep.subr.mxu0 0.0
          %1010 = vmatpush1.msra.mxu0 0.0
          %1011 = vmatprep.subr.mxu0 0.0
          %1012 = vmatpush1.msra.mxu0 0.0
          %1013 = vmatprep.subr.mxu0 0.0
          %1014 = vmatpush1.msra.mxu0 0.0
          %1015 = vmatprep.subr.mxu0 0.0
          %1016 = vmatpush1.msra.mxu0 0.0
          %1017 = vmatprep.subr.mxu0 0.0
          %1018 = vmatpush1.msra.mxu0 0.0
          %1019 = vmatprep.subr.mxu0 0.0
          %1020 = vmatpush1.msra.mxu0 0.0
          %1021 = vmatprep.subr.mxu0 0.0
          %1022 = vmatpush1.msra.mxu0 0.0
          %1023 = vmatprep.subr.mxu0 0.0
          %1024 = vmatpush1.msra.mxu0 0.0
          %1025 = vmatprep.subr.mxu0 0.0
          %1026 = vmatpush1.msra.mxu0 0.0
          %1027 = vmatprep.subr.mxu0 0.0
          %1028 = vmatpush1.msra.mxu0 0.0
          %1029 = vmatprep.subr.mxu0 0.0
          %1030 = vmatpush1.msra.mxu0 0.0
          %1031 = vmatprep.subr.mxu0 0.0
          %1032 = vmatpush1.msra.mxu0 0.0
          %1033 = vmatprep.subr.mxu0 0.0
          %1034 = vmatpush1.msra.mxu0 0.0
          %1035 = vmatprep.subr.mxu0 0.0
          %1036 = vmatpush1.msra.mxu0 0.0
          %1037 = vmatprep.subr.mxu0 0.0
          %1038 = vmatpush1.msra.mxu0 0.0
          %1039 = vmatprep.subr.mxu0 0.0
          %1040 = vmatpush1.msra.mxu0 %v1004
          %1041 = vmatprep.subr.mxu0 0.0
          %1042 = vmatpush2.msra.mxu0 0.0
          %1043 = vmatprep.subr.mxu0 0.0
          %1044 = vmatpush2.msra.mxu0 0.0
          %1045 = vmatprep.subr.mxu0 0.0
          %1046 = vmatpush2.msra.mxu0 0.0
          %1047 = vmatprep.subr.mxu0 0.0
          %1048 = vmatpush2.msra.mxu0 0.0
          %1049 = vmatprep.subr.mxu0 0.0
          %1050 = vmatpush2.msra.mxu0 0.0
          %1051 = vmatprep.subr.mxu0 0.0
          %1052 = vmatpush2.msra.mxu0 0.0
          %1053 = vmatprep.subr.mxu0 0.0
          %1054 = vmatpush2.msra.mxu0 0.0
          %1055 = vmatprep.subr.mxu0 0.0
          %1056 = vmatpush2.msra.mxu0 0.0
          %1057 = vmatprep.subr.mxu0 0.0
          %1058 = vmatpush2.msra.mxu0 0.0
          %1059 = vmatprep.subr.mxu0 0.0
          %1060 = vmatpush2.msra.mxu0 0.0
          %1061 = vmatprep.subr.mxu0 0.0
          %1062 = vmatpush2.msra.mxu0 0.0
          %1063 = vmatprep.subr.mxu0 0.0
          %1064 = vmatpush2.msra.mxu0 0.0
          %1065 = vmatprep.subr.mxu0 0.0
          %1066 = vmatpush2.msra.mxu0 0.0
          %1067 = vmatprep.subr.mxu0 0.0
          %1068 = vmatpush2.msra.mxu0 0.0
          %1069 = vmatprep.subr.mxu0 0.0
          %1070 = vmatpush2.msra.mxu0 0.0
          %1071 = vmatprep.subr.mxu0 0.0
          %1072 = vmatpush2.msra.mxu0 0.0
          %1073 = vmatprep.mubr.f32.mxu0 0.0
          %1074 = vmatmul.mubr.f32.gmra.mxu0 %v1007
          %v1075 = vpop.f32.mrf.mxu0
          %v1076 = vadd.f32 0.0, %v1075
          %v1077 = vpop.f32.mrf.mxu0
          %1078 = vdwg.mxu0
          %v1079 = vld [vmem:[#allocation4] sm:$0xff]
          %1081 = vset.pattern.permute.xlu0 0
          %1082 = vperm.xlu0 %1081, %v985
          %v1083 = vpop.permute.xlu0 %1082
          %v1085 = vmul.f32 %v1083, %v1079
          %1087 = vrot.lane.b32.xlu0 %v1076, 96
          %v1088 = vpop.permute.xlu0 %1087
          %v1090 = vadd.f32 %v1085, %v1088
          %vm1091 = vcmask 1048320
          %1092 = vst.msk [vmem:[#allocation4] sm:$0xff] %vm1091, %v1090
        $region52: #{tpu_custom_call.1} parent=31 // pred_fallthru
          _
        // Predicated region
        $region53: #{tpu_custom_call.1} parent=31 // pred_check
          %p1093 = pneg %p287
        $region54: #{tpu_custom_call.1} parent=31 // pred_check_branch
          %1095 = sbr.rel (%p1093) target = $region56
        $region55: #{tpu_custom_call.1} parent=31 // pred_region
          %v1096 = vld [vmem:[#allocation4] sm:$0xff]
          %v1097 = vld [vmem:[#allocation3] sm:$0xff]
          %1099 = vset.pattern.permute.xlu0 0
          %1100 = vperm.xlu0 %1099, %v1097
          %v1101 = vpop.permute.xlu0 %1100
          %v1103 = vrcp.pop %v1101
          %v1104 = vmul.f32 %v1096, %v1103
          %vm1105 = vcmask 261120
          %1106 = vst.msk [vmem:[#allocation4] sm:$0xff] %vm1105, %v1104
          %v1107 = vld [vmem:[#allocation4] sm:$0xff]
          %s1108 = scalar_lea.vmem [#allocation3], 8
          %v1109 = vld [vmem:[%s1108] sm:$0xff]
          %1111 = vset.pattern.permute.xlu0 0
          %1112 = vperm.xlu0 %1111, %v1109
          %v1113 = vpop.permute.xlu0 %1112
          %v1115 = vrcp.pop %v1113
          %v1116 = vmul.f32 %v1107, %v1115
          %vm1117 = vcmask 523520
          %1118 = vst.msk [vmem:[#allocation4] sm:$0xff] %vm1117, %v1116
          %v1119 = vld [vmem:[#allocation4] sm:$0xff]
          %s1120 = scalar_lea.vmem [#allocation3], 16
          %v1121 = vld [vmem:[%s1120] sm:$0xff]
          %1123 = vset.pattern.permute.xlu0 0
          %1124 = vperm.xlu0 %1123, %v1121
          %v1125 = vpop.permute.xlu0 %1124
          %v1127 = vrcp.pop %v1125
          %v1128 = vmul.f32 %v1119, %v1127
          %vm1129 = vcmask 785920
          %1130 = vst.msk [vmem:[#allocation4] sm:$0xff] %vm1129, %v1128
          %v1131 = vld [vmem:[#allocation4] sm:$0xff]
          %s1132 = scalar_lea.vmem [#allocation3], 24
          %v1133 = vld [vmem:[%s1132] sm:$0xff]
          %1135 = vset.pattern.permute.xlu0 0
          %1136 = vperm.xlu0 %1135, %v1133
          %v1137 = vpop.permute.xlu0 %1136
          %v1139 = vrcp.pop %v1137
          %v1140 = vmul.f32 %v1131, %v1139
          %vm1141 = vcmask 1048320
          %1142 = vst.msk [vmem:[#allocation4] sm:$0xff] %vm1141, %v1140
          %v1143 = vld [vmem:[#allocation4] sm:$0xff]
          %1144 = vst [vmem:[%s286] sm:$0xff] %v1143
        $region56: #{tpu_custom_call.1} parent=31 // pred_fallthru
          _
        %s1145 = sand.u32 %s136, 1
        %s1146 = scalar_lea.sflag [#allocation7], %s1145
        %s1147 = sand.u32 %s136, 1
        %s1148 = smul.addr %s1147, 8
        %s1149 = scalar_lea.vmem [#allocation11], %s1148
        // Predicated region
        $region57: #{tpu_custom_call.1} parent=31 // pred_check
          %p1150 = pneg %p146
        $region58: #{tpu_custom_call.1} parent=31 // pred_check_branch
          %1152 = sbr.rel (%p1150) target = $region60
        $region59: #{tpu_custom_call.1} parent=31 // pred_region
          %s1154 = ssub.s32 128, 128
          %1155 = vsyncadd %s1146, %s1154
          %s1156 = sadd.s32 %s29, %s28
          %s1157 = smul.addr %s1156, 128
          %s1158 = scalar_lea.hbm %s3, %s1157
          %s1160 = sshll.u32 %s1149, 4
          %s1161 = int_to_ptr.vmem [resolvable:$true] %s1160
          %1163 = dma.vmem_to_hbm [thread:$0]  %s1161, 128, %s1158, %s1146
        $region60: #{tpu_custom_call.1} parent=31 // pred_fallthru
          _
      $region32: #{tpu_custom_call.1} parent=5 // pred_fallthru
        _
      %p1164 = scmp.le.s32.totalorder 2, %s18
      // Predicated region
      $region61: #{tpu_custom_call.1} parent=5 // pred_check
        %p1165 = pneg %p1164
      $region62: #{tpu_custom_call.1} parent=5 // pred_check_branch
        %1167 = sbr.rel (%p1165) target = $region64
      $region63: #{tpu_custom_call.1} parent=5 // pred_region
        %s1168 = ssub.s32 %s18, 2
        // Predicated region
        $region65: #{tpu_custom_call.1} parent=63 // pred_check
          %p1169 = pneg %p152
        $region66: #{tpu_custom_call.1} parent=63 // pred_check_branch
          %1171 = sbr.rel (%p1169) target = $region68
        $region67: #{tpu_custom_call.1} parent=63 // pred_region
          %s1172 = sand.u32 %s137, 1
          %s1173 = scalar_lea.sflag [#allocation7], %s1172
          %s1174 = sand.u32 %s137, 1
          %s1175 = smul.addr %s1174, 8
          %s1176 = scalar_lea.vmem [#allocation11], %s1175
          %1177 = dma.done %s1173, 128
        $region68: #{tpu_custom_call.1} parent=63 // pred_fallthru
          _
      $region64: #{tpu_custom_call.1} parent=5 // pred_fallthru
        _
    $region6: #{tpu_custom_call.1} parent=1 // loop_footer
      %s22 = sadd.s32 1, %s18
    $region7: #{tpu_custom_call.1} parent=1 // loop_footer_branch
      %17 = sbr.rel target = $region3
    $region8: #{tpu_custom_call.1} parent=1 // loop_exit
      _
    %1178 = vsyncpa [#allocation6], 1
    %s1179 = scalar_lea.sflag [#allocation6], 1
    %1180 = vsyncpa %s1179, 1
    %1181 = vsyncpa [#allocation9], 1
    %s1182 = scalar_lea.sflag [#allocation9], 1
    %1183 = vsyncpa %s1182, 1
    %1184 = vsyncpa [#allocation7], 1
    %s1185 = scalar_lea.sflag [#allocation7], 1
    %1186 = vsyncpa %s1185, 1

</llo_original>
